<compile_context>
chip_gen: v7x
topology: tpu7x:2x2x1
jax: 0.10.0
libtpu: 0.0.40
codegen_flags: <defaults>
</compile_context>

<pallas_src>
import math
from functools import partial

import jax
import jax.numpy as jnp
from jax.experimental import pallas as pl
from jax.experimental.pallas import tpu as pltpu


# ---------------------------------------------------------------------------
# In-kernel helpers
# ---------------------------------------------------------------------------
def _layer_norm(x, gamma, beta, eps=1e-5):
    # PyTorch LayerNorm: biased variance over the last dim, in f32.
    mu = jnp.mean(x, axis=-1, keepdims=True)
    var = jnp.mean((x - mu) ** 2, axis=-1, keepdims=True)
    return (x - mu) * jax.lax.rsqrt(var + eps) * gamma + beta


def _pick_batch_block(batch, seq, target_rows=256, max_rows=512):
    """Pick Bt (a divisor of `batch`) so Bt*seq reaches ~256 MXU rows
    (v6e/v7x granularity; 128 already suffices on v5e) while keeping the
    per-step activation footprint VMEM-friendly (important on v7x, 64 MiB)."""
    best = 1
    for cand in range(2, batch + 1):
        if batch % cand or cand * seq > max_rows:
            continue
        best = cand
        if cand * seq >= target_rows:
            break
    return best


# ---------------------------------------------------------------------------
# Pallas kernel: one grid step = one block of Bt batch elements, end-to-end
# (fused QKV, attention, out-proj, LN1, FFN, LN2), writing the partial sum
# over those Bt elements (for the batch mean) as a lane-dense (1, S, E) block.
# ---------------------------------------------------------------------------
def transformer_classifier_kernel(
    x_ref,                       # (Bt, S, E) f32  : block of batch elements
    wqkv_ref, bqkv_ref,          # (E, 3E) bf16, (1, 3E) f32
    wo_ref, bo_ref,              # (E, E)  bf16, (1, E)  f32
    g1_ref, be1_ref,             # (1, E) f32
    w1_ref, bb1_ref,             # (E, H) bf16,  (1, H) f32
    w2_ref, bb2_ref,             # (H, E) bf16,  (1, E) f32
    g2_ref, be2_ref,             # (1, E) f32
    psum_ref,                    # (1, S, E) f32 out: sum of h2 over this block
    *, num_heads,
):
    bt, seq, emb = x_ref.shape
    hd = emb // num_heads
    scale = 1.0 / math.sqrt(hd)
    rows = bt * seq

    x = x_ref[...].reshape(rows, emb)                   # (Bt*S, E) f32
    x16 = x.astype(jnp.bfloat16)

    # ---- fused QKV projection: one (Bt*S, E) @ (E, 3E) MXU GEMM, f32 accum.
    qkv = (jnp.dot(x16, wqkv_ref[...], preferred_element_type=jnp.float32)
           + bqkv_ref[...])                             # (Bt*S, 3E) f32

    # ---- attention, batched over Bt (leading batch dim in both dot_generals)
    #      per-head operands via static lane slices; FLOPs here are negligible
    #      vs the projection/FFN GEMMs, so f32 precision is kept.
    heads_out = []
    for h in range(num_heads):
        q = qkv[:, h * hd:(h + 1) * hd].reshape(bt, seq, hd)
        k = qkv[:, emb + h * hd:emb + (h + 1) * hd].reshape(bt, seq, hd)
        v = qkv[:, 2 * emb + h * hd:2 * emb + (h + 1) * hd].reshape(bt, seq, hd)
        s = jnp.einsum("bqd,bkd->bqk", q, k,
                       preferred_element_type=jnp.float32) * scale
        s = s - jnp.max(s, axis=-1, keepdims=True)      # stable softmax
        p = jnp.exp(s)
        p = p * pl.reciprocal(jnp.sum(p, axis=-1, keepdims=True), approx=True)
        o = jnp.einsum("bqk,bkd->bqd", p, v,
                       preferred_element_type=jnp.float32)
        heads_out.append(o.reshape(rows, hd))
    att = jnp.concatenate(heads_out, axis=-1)           # (Bt*S, E)

    # ---- output projection
    att = (jnp.dot(att.astype(jnp.bfloat16), wo_ref[...],
                   preferred_element_type=jnp.float32) + bo_ref[...])

    # ---- residual + LayerNorm1 (f32)
    h1 = _layer_norm(x + att, g1_ref[...], be1_ref[...])

    # ---- feed-forward (bf16 GEMMs, f32 accumulation), ReLU in f32
    ff = (jnp.dot(h1.astype(jnp.bfloat16), w1_ref[...],
                  preferred_element_type=jnp.float32) + bb1_ref[...])
    ff = jnp.maximum(ff, 0.0)
    ff = (jnp.dot(ff.astype(jnp.bfloat16), w2_ref[...],
                  preferred_element_type=jnp.float32) + bb2_ref[...])

    # ---- residual + LayerNorm2; partial sum over this block's batch elements
    h2 = _layer_norm(h1 + ff, g2_ref[...], be2_ref[...])
    psum_ref[...] = jnp.sum(h2.reshape(bt, seq, emb), axis=0, keepdims=True)


# ---------------------------------------------------------------------------
# Parameter setup
# ---------------------------------------------------------------------------
def init_params(key, input_size, hidden_size):
    ks = jax.random.split(key, 8)
    std = 0.02
    E, H = input_size, hidden_size
    return dict(
        # in_proj (stored already transposed for x @ W)
        wq=jax.random.normal(ks[0], (E, E), jnp.float32) * std,
        wk=jax.random.normal(ks[1], (E, E), jnp.float32) * std,
        wv=jax.random.normal(ks[2], (E, E), jnp.float32) * std,
        bq=jnp.zeros((1, E), jnp.float32),
        bk=jnp.zeros((1, E), jnp.float32),
        bv=jnp.zeros((1, E), jnp.float32),
        # out_proj
        wo=jax.random.normal(ks[3], (E, E), jnp.float32) * std,
        bo=jnp.zeros((1, E), jnp.float32),
        # layer_norm1
        g1=jnp.ones((1, E), jnp.float32),
        be1=jnp.zeros((1, E), jnp.float32),
        # feedforward
        w1=jax.random.normal(ks[4], (E, H), jnp.float32) * std,
        bb1=jnp.zeros((1, H), jnp.float32),
        w2=jax.random.normal(ks[5], (H, E), jnp.float32) * std,
        bb2=jnp.zeros((1, E), jnp.float32),
        # layer_norm2
        g2=jnp.ones((1, E), jnp.float32),
        be2=jnp.zeros((1, E), jnp.float32),
        # fc (E -> 1)
        wfc=jax.random.normal(ks[6], (E, 1), jnp.float32) * std,
        bfc=jnp.zeros((1, 1), jnp.float32),
    )


# ---------------------------------------------------------------------------
# Wrapper: fuse/cast weights, build grid + BlockSpecs, call pallas_call,
# then a trivial XLA epilogue (batch mean + fc + sigmoid).
# ---------------------------------------------------------------------------
@partial(jax.jit, static_argnames=("num_heads",))
def transformer_classifier(x, params, *, num_heads):
    S, B, E = x.shape
    H = params["w1"].shape[1]

    # (S, B, E) -> (B, S, E): the grid iterates over blocks of batch elements.
    xb = jnp.transpose(x, (1, 0, 2))

    Bt = _pick_batch_block(B, S)
    nb = B // Bt

    # Fuse Q/K/V into one (E, 3E) weight outside the kernel; bf16 MXU weights.
    wqkv = jnp.concatenate([params["wq"], params["wk"], params["wv"]],
                           axis=1).astype(jnp.bfloat16)
    bqkv = jnp.concatenate([params["bq"], params["bk"], params["bv"]], axis=1)
    wo = params["wo"].astype(jnp.bfloat16)
    w1 = params["w1"].astype(jnp.bfloat16)
    w2 = params["w2"].astype(jnp.bfloat16)

    args = (xb, wqkv, bqkv, wo, params["bo"], params["g1"], params["be1"],
            w1, params["bb1"], w2, params["bb2"], params["g2"], params["be2"])

    def full(shape):
        # Resident weight block: constant index map -> fetched once.
        return pl.BlockSpec(shape, lambda i: (0, 0))

    in_specs = [
        pl.BlockSpec((Bt, S, E), lambda i: (i, 0, 0)),   # x (block of Bt elems)
        full((E, 3 * E)), full((1, 3 * E)),              # wqkv, bqkv
        full((E, E)), full((1, E)),                      # wo, bo
        full((1, E)), full((1, E)),                      # g1, be1
        full((E, H)), full((1, H)),                      # w1, bb1
        full((H, E)), full((1, E)),                      # w2, bb2
        full((1, E)), full((1, E)),                      # g2, be2
    ]

    hd = E // num_heads
    flops = int(B * S * (2 * E * 3 * E + 2 * E * E + 4 * E * H)
                + B * num_heads * S * S * hd * 4)
    cost = pl.CostEstimate(
        flops=flops,
        transcendentals=int(B * num_heads * S * S + 2 * B * S),
        bytes_accessed=int(4 * x.size + 4 * nb * S * E
                           + 2 * (wqkv.size + wo.size + w1.size + w2.size)
                           + 4 * (bqkv.size + 6 * E + H)))

    psums = pl.pallas_call(
        partial(transformer_classifier_kernel, num_heads=num_heads),
        out_shape=jax.ShapeDtypeStruct((nb, S, E), jnp.float32),
        grid_spec=pltpu.PrefetchScalarGridSpec(
            num_scalar_prefetch=0,
            grid=(nb,),                                  # parallel batch blocks
            in_specs=in_specs,
            out_specs=pl.BlockSpec((1, S, E), lambda i: (i, 0, 0)),
        ),
        compiler_params=pltpu.CompilerParams(
            dimension_semantics=("parallel",),           # megacore-friendly
            vmem_limit_bytes=64 * 1024 * 1024),
        cost_estimate=cost,
    )(*args)

    # Tiny epilogue (O(S*E) FLOPs): torch.mean(x, dim=1), fc (E -> 1), sigmoid.
    pooled = jnp.sum(psums, axis=0) * (1.0 / B)          # (S, E)
    logits = pooled @ params["wfc"] + params["bfc"]      # (S, 1)
    return jax.nn.sigmoid(logits)


# ---------------------------------------------------------------------------
# Pure-JAX f32 reference (same math) for correctness checking
# ---------------------------------------------------------------------------
def reference(x, p, num_heads):
    S, B, E = x.shape
    hd = E // num_heads
    q = x @ p["wq"] + p["bq"]
    k = x @ p["wk"] + p["bk"]
    v = x @ p["wv"] + p["bv"]
    qh = q.reshape(S, B, num_heads, hd)
    kh = k.reshape(S, B, num_heads, hd)
    vh = v.reshape(S, B, num_heads, hd)
    s = jnp.einsum("sbhd,tbhd->bhst", qh, kh) / math.sqrt(hd)
    a = jax.nn.softmax(s, axis=-1)
    o = jnp.einsum("bhst,tbhd->sbhd", a, vh).reshape(S, B, E)
    att = o @ p["wo"] + p["bo"]

    def ln(y, g, b):
        mu = jnp.mean(y, -1, keepdims=True)
        var = jnp.mean((y - mu) ** 2, -1, keepdims=True)
        return (y - mu) / jnp.sqrt(var + 1e-5) * g + b

    h1 = ln(x + att, p["g1"], p["be1"])
    ff = jnp.maximum(h1 @ p["w1"] + p["bb1"], 0.0) @ p["w2"] + p["bb2"]
    h2 = ln(h1 + ff, p["g2"], p["be2"])
    pooled = jnp.mean(h2, axis=1)
    return jax.nn.sigmoid(pooled @ p["wfc"] + p["bfc"])


# ---------------------------------------------------------------------------
if __name__ == "__main__":
    # Small shapes consistent with the module (input_size = embed dim).
    S, B = 8, 2                 # seq_len, batch
    input_size = 128            # embed dim (stand-in for 768)
    hidden_size = 256
    num_heads = 4               # head_dim = 32

    key = jax.random.PRNGKey(0)
    kx, kp = jax.random.split(key)
    x = jax.random.normal(kx, (S, B, input_size), jnp.float32)
    params = init_params(kp, input_size, hidden_size)

    out = transformer_classifier(x, params, num_heads=num_heads)
    out = jax.block_until_ready(out)

    ref = reference(x, params, num_heads)
    assert out.shape == (S, 1)
    # bf16 MXU path + approx reciprocal -> compare against the f32 reference
    # with a correspondingly relaxed tolerance.
    assert jnp.allclose(out, ref, atol=2e-2, rtol=2e-2), (out, ref)

    print("KERNEL_OK")
</pallas_src>

<mosaic_0001>
module attributes {stable_mosaic.version = 11 : i64} {
  func.func @transformer_classifier_kernel(%arg0: i32, %arg1: memref<2x8x128xf32, #tpu.memory_space<vmem>>, %arg2: memref<128x384xbf16, #tpu.memory_space<vmem>>, %arg3: memref<1x384xf32, #tpu.memory_space<vmem>>, %arg4: memref<128x128xbf16, #tpu.memory_space<vmem>>, %arg5: memref<1x128xf32, #tpu.memory_space<vmem>>, %arg6: memref<1x128xf32, #tpu.memory_space<vmem>>, %arg7: memref<1x128xf32, #tpu.memory_space<vmem>>, %arg8: memref<128x256xbf16, #tpu.memory_space<vmem>>, %arg9: memref<1x256xf32, #tpu.memory_space<vmem>>, %arg10: memref<256x128xbf16, #tpu.memory_space<vmem>>, %arg11: memref<1x128xf32, #tpu.memory_space<vmem>>, %arg12: memref<1x128xf32, #tpu.memory_space<vmem>>, %arg13: memref<1x128xf32, #tpu.memory_space<vmem>>, %arg14: memref<1x8x128xf32, #tpu.memory_space<vmem>>) attributes {dimension_semantics = [#tpu.dimension_semantics<parallel>], iteration_bounds = array<i64: 1>, scalar_prefetch = 0 : i64, scratch_operands = 0 : i64, tpu.core_type = #tpu.core_type<tc>, window_params = [{transform_indices = @transform_0, window_bounds = array<i64: 2, 8, 128>}, {pipeline_mode = #tpu.pipeline_mode<synchronous>, transform_indices = @transform_1, window_bounds = array<i64: 128, 384>}, {pipeline_mode = #tpu.pipeline_mode<synchronous>, transform_indices = @transform_2, window_bounds = array<i64: 1, 384>}, {pipeline_mode = #tpu.pipeline_mode<synchronous>, transform_indices = @transform_3, window_bounds = array<i64: 128, 128>}, {pipeline_mode = #tpu.pipeline_mode<synchronous>, transform_indices = @transform_4, window_bounds = array<i64: 1, 128>}, {pipeline_mode = #tpu.pipeline_mode<synchronous>, transform_indices = @transform_5, window_bounds = array<i64: 1, 128>}, {pipeline_mode = #tpu.pipeline_mode<synchronous>, transform_indices = @transform_6, window_bounds = array<i64: 1, 128>}, {pipeline_mode = #tpu.pipeline_mode<synchronous>, transform_indices = @transform_7, window_bounds = array<i64: 128, 256>}, {pipeline_mode = #tpu.pipeline_mode<synchronous>, transform_indices = @transform_8, window_bounds = array<i64: 1, 256>}, {pipeline_mode = #tpu.pipeline_mode<synchronous>, transform_indices = @transform_9, window_bounds = array<i64: 256, 128>}, {pipeline_mode = #tpu.pipeline_mode<synchronous>, transform_indices = @transform_10, window_bounds = array<i64: 1, 128>}, {pipeline_mode = #tpu.pipeline_mode<synchronous>, transform_indices = @transform_11, window_bounds = array<i64: 1, 128>}, {pipeline_mode = #tpu.pipeline_mode<synchronous>, transform_indices = @transform_12, window_bounds = array<i64: 1, 128>}, {transform_indices = @transform_13, window_bounds = array<i64: 1, 8, 128>}]} {
    %c0 = arith.constant 0 : index
    %c0_0 = arith.constant 0 : index
    %c0_1 = arith.constant 0 : index
    %0 = vector.load %arg1[%c0, %c0_0, %c0_1] : memref<2x8x128xf32, #tpu.memory_space<vmem>>, vector<2x8x128xf32>
    %1 = vector.shape_cast %0 : vector<2x8x128xf32> to vector<16x128xf32>
    %2 = arith.truncf %1 : vector<16x128xf32> to vector<16x128xbf16>
    %c0_2 = arith.constant 0 : index
    %c0_3 = arith.constant 0 : index
    %3 = vector.load %arg2[%c0_2, %c0_3] : memref<128x384xbf16, #tpu.memory_space<vmem>>, vector<128x384xbf16>
    %cst = arith.constant dense<0.000000e+00> : vector<16x384xf32>
    %4 = tpu.matmul %2, %3, %cst {dimension_numbers = #tpu.dot_dimension_numbers<[1], [0], [0], [1], [0, 0, 1, 1], [], []>} : vector<16x128xbf16>, vector<128x384xbf16>, vector<16x384xf32> -> vector<16x384xf32>
    %c0_4 = arith.constant 0 : index
    %c0_5 = arith.constant 0 : index
    %5 = vector.load %arg3[%c0_4, %c0_5] : memref<1x384xf32, #tpu.memory_space<vmem>>, vector<1x384xf32>
    %6 = vector.broadcast %5 : vector<1x384xf32> to vector<16x384xf32>
    %7 = arith.addf %4, %6 : vector<16x384xf32>
    %8 = vector.extract_strided_slice %7 {offsets = [0, 0], sizes = [16, 32], strides = [1, 1]} : vector<16x384xf32> to vector<16x32xf32>
    %9 = vector.shape_cast %8 : vector<16x32xf32> to vector<2x8x32xf32>
    %10 = vector.extract_strided_slice %7 {offsets = [0, 128], sizes = [16, 32], strides = [1, 1]} : vector<16x384xf32> to vector<16x32xf32>
    %11 = vector.shape_cast %10 : vector<16x32xf32> to vector<2x8x32xf32>
    %12 = vector.extract_strided_slice %7 {offsets = [0, 256], sizes = [16, 32], strides = [1, 1]} : vector<16x384xf32> to vector<16x32xf32>
    %13 = vector.shape_cast %12 : vector<16x32xf32> to vector<2x8x32xf32>
    "tpu.trace_start"() <{level = 10 : i32, message = "bqd,bkd->bqk"}> : () -> ()
    %cst_6 = arith.constant dense<0.000000e+00> : vector<2x8x8xf32>
    %14 = tpu.matmul %9, %11, %cst_6 {dimension_numbers = #tpu.dot_dimension_numbers<[2], [2], [1], [1], [0, 0, 0, 1, 1, 1], [0], [0]>} : vector<2x8x32xf32>, vector<2x8x32xf32>, vector<2x8x8xf32> -> vector<2x8x8xf32>
    "tpu.trace_stop"() : () -> ()
    %cst_7 = arith.constant 0.176776692 : f32
    %15 = vector.broadcast %cst_7 : f32 to vector<2x8x8xf32>
    %16 = arith.mulf %14, %15 : vector<2x8x8xf32>
    %cst_8 = arith.constant dense<0xFF800000> : vector<2x8xf32>
    %17 = vector.multi_reduction <maximumf>, %16, %cst_8 [2] : vector<2x8x8xf32> to vector<2x8xf32>
    %18 = vector.shape_cast %17 : vector<2x8xf32> to vector<2x8x1xf32>
    %19 = vector.broadcast %18 : vector<2x8x1xf32> to vector<2x8x8xf32>
    %20 = arith.subf %16, %19 : vector<2x8x8xf32>
    %21 = math.exp %20 : vector<2x8x8xf32>
    %cst_9 = arith.constant dense<0.000000e+00> : vector<2x8xf32>
    %22 = vector.multi_reduction <add>, %21, %cst_9 [2] : vector<2x8x8xf32> to vector<2x8xf32>
    %23 = vector.shape_cast %22 : vector<2x8xf32> to vector<2x8x1xf32>
    %24 = tpu.reciprocal %23 {approx = true} : vector<2x8x1xf32> -> vector<2x8x1xf32>
    %25 = vector.broadcast %24 : vector<2x8x1xf32> to vector<2x8x8xf32>
    %26 = arith.mulf %21, %25 : vector<2x8x8xf32>
    "tpu.trace_start"() <{level = 10 : i32, message = "bqk,bkd->bqd"}> : () -> ()
    %cst_10 = arith.constant dense<0.000000e+00> : vector<2x8x32xf32>
    %27 = tpu.matmul %26, %13, %cst_10 {dimension_numbers = #tpu.dot_dimension_numbers<[2], [1], [1], [2], [0, 0, 0, 1, 1, 2], [0], [0]>} : vector<2x8x8xf32>, vector<2x8x32xf32>, vector<2x8x32xf32> -> vector<2x8x32xf32>
    "tpu.trace_stop"() : () -> ()
    %28 = vector.shape_cast %27 : vector<2x8x32xf32> to vector<16x32xf32>
    %29 = vector.extract_strided_slice %7 {offsets = [0, 32], sizes = [16, 32], strides = [1, 1]} : vector<16x384xf32> to vector<16x32xf32>
    %30 = vector.shape_cast %29 : vector<16x32xf32> to vector<2x8x32xf32>
    %31 = vector.extract_strided_slice %7 {offsets = [0, 160], sizes = [16, 32], strides = [1, 1]} : vector<16x384xf32> to vector<16x32xf32>
    %32 = vector.shape_cast %31 : vector<16x32xf32> to vector<2x8x32xf32>
    %33 = vector.extract_strided_slice %7 {offsets = [0, 288], sizes = [16, 32], strides = [1, 1]} : vector<16x384xf32> to vector<16x32xf32>
    %34 = vector.shape_cast %33 : vector<16x32xf32> to vector<2x8x32xf32>
    "tpu.trace_start"() <{level = 10 : i32, message = "bqd,bkd->bqk"}> : () -> ()
    %cst_11 = arith.constant dense<0.000000e+00> : vector<2x8x8xf32>
    %35 = tpu.matmul %30, %32, %cst_11 {dimension_numbers = #tpu.dot_dimension_numbers<[2], [2], [1], [1], [0, 0, 0, 1, 1, 1], [0], [0]>} : vector<2x8x32xf32>, vector<2x8x32xf32>, vector<2x8x8xf32> -> vector<2x8x8xf32>
    "tpu.trace_stop"() : () -> ()
    %cst_12 = arith.constant 0.176776692 : f32
    %36 = vector.broadcast %cst_12 : f32 to vector<2x8x8xf32>
    %37 = arith.mulf %35, %36 : vector<2x8x8xf32>
    %cst_13 = arith.constant dense<0xFF800000> : vector<2x8xf32>
    %38 = vector.multi_reduction <maximumf>, %37, %cst_13 [2] : vector<2x8x8xf32> to vector<2x8xf32>
    %39 = vector.shape_cast %38 : vector<2x8xf32> to vector<2x8x1xf32>
    %40 = vector.broadcast %39 : vector<2x8x1xf32> to vector<2x8x8xf32>
    %41 = arith.subf %37, %40 : vector<2x8x8xf32>
    %42 = math.exp %41 : vector<2x8x8xf32>
    %cst_14 = arith.constant dense<0.000000e+00> : vector<2x8xf32>
    %43 = vector.multi_reduction <add>, %42, %cst_14 [2] : vector<2x8x8xf32> to vector<2x8xf32>
    %44 = vector.shape_cast %43 : vector<2x8xf32> to vector<2x8x1xf32>
    %45 = tpu.reciprocal %44 {approx = true} : vector<2x8x1xf32> -> vector<2x8x1xf32>
    %46 = vector.broadcast %45 : vector<2x8x1xf32> to vector<2x8x8xf32>
    %47 = arith.mulf %42, %46 : vector<2x8x8xf32>
    "tpu.trace_start"() <{level = 10 : i32, message = "bqk,bkd->bqd"}> : () -> ()
    %cst_15 = arith.constant dense<0.000000e+00> : vector<2x8x32xf32>
    %48 = tpu.matmul %47, %34, %cst_15 {dimension_numbers = #tpu.dot_dimension_numbers<[2], [1], [1], [2], [0, 0, 0, 1, 1, 2], [0], [0]>} : vector<2x8x8xf32>, vector<2x8x32xf32>, vector<2x8x32xf32> -> vector<2x8x32xf32>
    "tpu.trace_stop"() : () -> ()
    %49 = vector.shape_cast %48 : vector<2x8x32xf32> to vector<16x32xf32>
    %50 = vector.extract_strided_slice %7 {offsets = [0, 64], sizes = [16, 32], strides = [1, 1]} : vector<16x384xf32> to vector<16x32xf32>
    %51 = vector.shape_cast %50 : vector<16x32xf32> to vector<2x8x32xf32>
    %52 = vector.extract_strided_slice %7 {offsets = [0, 192], sizes = [16, 32], strides = [1, 1]} : vector<16x384xf32> to vector<16x32xf32>
    %53 = vector.shape_cast %52 : vector<16x32xf32> to vector<2x8x32xf32>
    %54 = vector.extract_strided_slice %7 {offsets = [0, 320], sizes = [16, 32], strides = [1, 1]} : vector<16x384xf32> to vector<16x32xf32>
    %55 = vector.shape_cast %54 : vector<16x32xf32> to vector<2x8x32xf32>
    "tpu.trace_start"() <{level = 10 : i32, message = "bqd,bkd->bqk"}> : () -> ()
    %cst_16 = arith.constant dense<0.000000e+00> : vector<2x8x8xf32>
    %56 = tpu.matmul %51, %53, %cst_16 {dimension_numbers = #tpu.dot_dimension_numbers<[2], [2], [1], [1], [0, 0, 0, 1, 1, 1], [0], [0]>} : vector<2x8x32xf32>, vector<2x8x32xf32>, vector<2x8x8xf32> -> vector<2x8x8xf32>
    "tpu.trace_stop"() : () -> ()
    %cst_17 = arith.constant 0.176776692 : f32
    %57 = vector.broadcast %cst_17 : f32 to vector<2x8x8xf32>
    %58 = arith.mulf %56, %57 : vector<2x8x8xf32>
    %cst_18 = arith.constant dense<0xFF800000> : vector<2x8xf32>
    %59 = vector.multi_reduction <maximumf>, %58, %cst_18 [2] : vector<2x8x8xf32> to vector<2x8xf32>
    %60 = vector.shape_cast %59 : vector<2x8xf32> to vector<2x8x1xf32>
    %61 = vector.broadcast %60 : vector<2x8x1xf32> to vector<2x8x8xf32>
    %62 = arith.subf %58, %61 : vector<2x8x8xf32>
    %63 = math.exp %62 : vector<2x8x8xf32>
    %cst_19 = arith.constant dense<0.000000e+00> : vector<2x8xf32>
    %64 = vector.multi_reduction <add>, %63, %cst_19 [2] : vector<2x8x8xf32> to vector<2x8xf32>
    %65 = vector.shape_cast %64 : vector<2x8xf32> to vector<2x8x1xf32>
    %66 = tpu.reciprocal %65 {approx = true} : vector<2x8x1xf32> -> vector<2x8x1xf32>
    %67 = vector.broadcast %66 : vector<2x8x1xf32> to vector<2x8x8xf32>
    %68 = arith.mulf %63, %67 : vector<2x8x8xf32>
    "tpu.trace_start"() <{level = 10 : i32, message = "bqk,bkd->bqd"}> : () -> ()
    %cst_20 = arith.constant dense<0.000000e+00> : vector<2x8x32xf32>
    %69 = tpu.matmul %68, %55, %cst_20 {dimension_numbers = #tpu.dot_dimension_numbers<[2], [1], [1], [2], [0, 0, 0, 1, 1, 2], [0], [0]>} : vector<2x8x8xf32>, vector<2x8x32xf32>, vector<2x8x32xf32> -> vector<2x8x32xf32>
    "tpu.trace_stop"() : () -> ()
    %70 = vector.shape_cast %69 : vector<2x8x32xf32> to vector<16x32xf32>
    %71 = vector.extract_strided_slice %7 {offsets = [0, 96], sizes = [16, 32], strides = [1, 1]} : vector<16x384xf32> to vector<16x32xf32>
    %72 = vector.shape_cast %71 : vector<16x32xf32> to vector<2x8x32xf32>
    %73 = vector.extract_strided_slice %7 {offsets = [0, 224], sizes = [16, 32], strides = [1, 1]} : vector<16x384xf32> to vector<16x32xf32>
    %74 = vector.shape_cast %73 : vector<16x32xf32> to vector<2x8x32xf32>
    %75 = vector.extract_strided_slice %7 {offsets = [0, 352], sizes = [16, 32], strides = [1, 1]} : vector<16x384xf32> to vector<16x32xf32>
    %76 = vector.shape_cast %75 : vector<16x32xf32> to vector<2x8x32xf32>
    "tpu.trace_start"() <{level = 10 : i32, message = "bqd,bkd->bqk"}> : () -> ()
    %cst_21 = arith.constant dense<0.000000e+00> : vector<2x8x8xf32>
    %77 = tpu.matmul %72, %74, %cst_21 {dimension_numbers = #tpu.dot_dimension_numbers<[2], [2], [1], [1], [0, 0, 0, 1, 1, 1], [0], [0]>} : vector<2x8x32xf32>, vector<2x8x32xf32>, vector<2x8x8xf32> -> vector<2x8x8xf32>
    "tpu.trace_stop"() : () -> ()
    %cst_22 = arith.constant 0.176776692 : f32
    %78 = vector.broadcast %cst_22 : f32 to vector<2x8x8xf32>
    %79 = arith.mulf %77, %78 : vector<2x8x8xf32>
    %cst_23 = arith.constant dense<0xFF800000> : vector<2x8xf32>
    %80 = vector.multi_reduction <maximumf>, %79, %cst_23 [2] : vector<2x8x8xf32> to vector<2x8xf32>
    %81 = vector.shape_cast %80 : vector<2x8xf32> to vector<2x8x1xf32>
    %82 = vector.broadcast %81 : vector<2x8x1xf32> to vector<2x8x8xf32>
    %83 = arith.subf %79, %82 : vector<2x8x8xf32>
    %84 = math.exp %83 : vector<2x8x8xf32>
    %cst_24 = arith.constant dense<0.000000e+00> : vector<2x8xf32>
    %85 = vector.multi_reduction <add>, %84, %cst_24 [2] : vector<2x8x8xf32> to vector<2x8xf32>
    %86 = vector.shape_cast %85 : vector<2x8xf32> to vector<2x8x1xf32>
    %87 = tpu.reciprocal %86 {approx = true} : vector<2x8x1xf32> -> vector<2x8x1xf32>
    %88 = vector.broadcast %87 : vector<2x8x1xf32> to vector<2x8x8xf32>
    %89 = arith.mulf %84, %88 : vector<2x8x8xf32>
    "tpu.trace_start"() <{level = 10 : i32, message = "bqk,bkd->bqd"}> : () -> ()
    %cst_25 = arith.constant dense<0.000000e+00> : vector<2x8x32xf32>
    %90 = tpu.matmul %89, %76, %cst_25 {dimension_numbers = #tpu.dot_dimension_numbers<[2], [1], [1], [2], [0, 0, 0, 1, 1, 2], [0], [0]>} : vector<2x8x8xf32>, vector<2x8x32xf32>, vector<2x8x32xf32> -> vector<2x8x32xf32>
    "tpu.trace_stop"() : () -> ()
    %91 = vector.shape_cast %90 : vector<2x8x32xf32> to vector<16x32xf32>
    %92 = tpu.concatenate %28, %49, %70, %91 in 1 : vector<16x32xf32>, vector<16x32xf32>, vector<16x32xf32>, vector<16x32xf32> -> vector<16x128xf32>
    %93 = arith.truncf %92 : vector<16x128xf32> to vector<16x128xbf16>
    %c0_26 = arith.constant 0 : index
    %c0_27 = arith.constant 0 : index
    %94 = vector.load %arg4[%c0_26, %c0_27] : memref<128x128xbf16, #tpu.memory_space<vmem>>, vector<128x128xbf16>
    %cst_28 = arith.constant dense<0.000000e+00> : vector<16x128xf32>
    %95 = tpu.matmul %93, %94, %cst_28 {dimension_numbers = #tpu.dot_dimension_numbers<[1], [0], [0], [1], [0, 0, 1, 1], [], []>} : vector<16x128xbf16>, vector<128x128xbf16>, vector<16x128xf32> -> vector<16x128xf32>
    %c0_29 = arith.constant 0 : index
    %c0_30 = arith.constant 0 : index
    %96 = vector.load %arg5[%c0_29, %c0_30] : memref<1x128xf32, #tpu.memory_space<vmem>>, vector<1x128xf32>
    %97 = vector.broadcast %96 : vector<1x128xf32> to vector<16x128xf32>
    %98 = arith.addf %95, %97 : vector<16x128xf32>
    %99 = arith.addf %1, %98 : vector<16x128xf32>
    %c0_31 = arith.constant 0 : index
    %c0_32 = arith.constant 0 : index
    %100 = vector.load %arg6[%c0_31, %c0_32] : memref<1x128xf32, #tpu.memory_space<vmem>>, vector<1x128xf32>
    %c0_33 = arith.constant 0 : index
    %c0_34 = arith.constant 0 : index
    %101 = vector.load %arg7[%c0_33, %c0_34] : memref<1x128xf32, #tpu.memory_space<vmem>>, vector<1x128xf32>
    %cst_35 = arith.constant dense<0.000000e+00> : vector<16xf32>
    %102 = vector.multi_reduction <add>, %99, %cst_35 [1] : vector<16x128xf32> to vector<16xf32>
    %103 = vector.shape_cast %102 : vector<16xf32> to vector<16x1xf32>
    %cst_36 = arith.constant 1.280000e+02 : f32
    %104 = vector.broadcast %cst_36 : f32 to vector<16x1xf32>
    %105 = arith.divf %103, %104 : vector<16x1xf32>
    %106 = vector.broadcast %105 : vector<16x1xf32> to vector<16x128xf32>
    %107 = arith.subf %99, %106 : vector<16x128xf32>
    %108 = arith.mulf %107, %107 : vector<16x128xf32>
    %cst_37 = arith.constant dense<0.000000e+00> : vector<16xf32>
    %109 = vector.multi_reduction <add>, %108, %cst_37 [1] : vector<16x128xf32> to vector<16xf32>
    %110 = vector.shape_cast %109 : vector<16xf32> to vector<16x1xf32>
    %cst_38 = arith.constant 1.280000e+02 : f32
    %111 = vector.broadcast %cst_38 : f32 to vector<16x1xf32>
    %112 = arith.divf %110, %111 : vector<16x1xf32>
    %113 = vector.broadcast %105 : vector<16x1xf32> to vector<16x128xf32>
    %114 = arith.subf %99, %113 : vector<16x128xf32>
    %cst_39 = arith.constant 9.99999974E-6 : f32
    %115 = vector.broadcast %cst_39 : f32 to vector<16x1xf32>
    %116 = arith.addf %112, %115 : vector<16x1xf32>
    %117 = math.rsqrt %116 : vector<16x1xf32>
    %118 = vector.broadcast %117 : vector<16x1xf32> to vector<16x128xf32>
    %119 = arith.mulf %114, %118 : vector<16x128xf32>
    %120 = vector.broadcast %100 : vector<1x128xf32> to vector<16x128xf32>
    %121 = arith.mulf %119, %120 : vector<16x128xf32>
    %122 = vector.broadcast %101 : vector<1x128xf32> to vector<16x128xf32>
    %123 = arith.addf %121, %122 : vector<16x128xf32>
    %124 = arith.truncf %123 : vector<16x128xf32> to vector<16x128xbf16>
    %c0_40 = arith.constant 0 : index
    %c0_41 = arith.constant 0 : index
    %125 = vector.load %arg8[%c0_40, %c0_41] : memref<128x256xbf16, #tpu.memory_space<vmem>>, vector<128x256xbf16>
    %cst_42 = arith.constant dense<0.000000e+00> : vector<16x256xf32>
    %126 = tpu.matmul %124, %125, %cst_42 {dimension_numbers = #tpu.dot_dimension_numbers<[1], [0], [0], [1], [0, 0, 1, 1], [], []>} : vector<16x128xbf16>, vector<128x256xbf16>, vector<16x256xf32> -> vector<16x256xf32>
    %c0_43 = arith.constant 0 : index
    %c0_44 = arith.constant 0 : index
    %127 = vector.load %arg9[%c0_43, %c0_44] : memref<1x256xf32, #tpu.memory_space<vmem>>, vector<1x256xf32>
    %128 = vector.broadcast %127 : vector<1x256xf32> to vector<16x256xf32>
    %129 = arith.addf %126, %128 : vector<16x256xf32>
    %cst_45 = arith.constant 0.000000e+00 : f32
    %130 = vector.broadcast %cst_45 : f32 to vector<16x256xf32>
    %131 = arith.maximumf %129, %130 : vector<16x256xf32>
    %132 = arith.truncf %131 : vector<16x256xf32> to vector<16x256xbf16>
    %c0_46 = arith.constant 0 : index
    %c0_47 = arith.constant 0 : index
    %133 = vector.load %arg10[%c0_46, %c0_47] : memref<256x128xbf16, #tpu.memory_space<vmem>>, vector<256x128xbf16>
    %cst_48 = arith.constant dense<0.000000e+00> : vector<16x128xf32>
    %134 = tpu.matmul %132, %133, %cst_48 {dimension_numbers = #tpu.dot_dimension_numbers<[1], [0], [0], [1], [0, 0, 1, 1], [], []>} : vector<16x256xbf16>, vector<256x128xbf16>, vector<16x128xf32> -> vector<16x128xf32>
    %c0_49 = arith.constant 0 : index
    %c0_50 = arith.constant 0 : index
    %135 = vector.load %arg11[%c0_49, %c0_50] : memref<1x128xf32, #tpu.memory_space<vmem>>, vector<1x128xf32>
    %136 = vector.broadcast %135 : vector<1x128xf32> to vector<16x128xf32>
    %137 = arith.addf %134, %136 : vector<16x128xf32>
    %138 = arith.addf %123, %137 : vector<16x128xf32>
    %c0_51 = arith.constant 0 : index
    %c0_52 = arith.constant 0 : index
    %139 = vector.load %arg12[%c0_51, %c0_52] : memref<1x128xf32, #tpu.memory_space<vmem>>, vector<1x128xf32>
    %c0_53 = arith.constant 0 : index
    %c0_54 = arith.constant 0 : index
    %140 = vector.load %arg13[%c0_53, %c0_54] : memref<1x128xf32, #tpu.memory_space<vmem>>, vector<1x128xf32>
    %cst_55 = arith.constant dense<0.000000e+00> : vector<16xf32>
    %141 = vector.multi_reduction <add>, %138, %cst_55 [1] : vector<16x128xf32> to vector<16xf32>
    %142 = vector.shape_cast %141 : vector<16xf32> to vector<16x1xf32>
    %cst_56 = arith.constant 1.280000e+02 : f32
    %143 = vector.broadcast %cst_56 : f32 to vector<16x1xf32>
    %144 = arith.divf %142, %143 : vector<16x1xf32>
    %145 = vector.broadcast %144 : vector<16x1xf32> to vector<16x128xf32>
    %146 = arith.subf %138, %145 : vector<16x128xf32>
    %147 = arith.mulf %146, %146 : vector<16x128xf32>
    %cst_57 = arith.constant dense<0.000000e+00> : vector<16xf32>
    %148 = vector.multi_reduction <add>, %147, %cst_57 [1] : vector<16x128xf32> to vector<16xf32>
    %149 = vector.shape_cast %148 : vector<16xf32> to vector<16x1xf32>
    %cst_58 = arith.constant 1.280000e+02 : f32
    %150 = vector.broadcast %cst_58 : f32 to vector<16x1xf32>
    %151 = arith.divf %149, %150 : vector<16x1xf32>
    %152 = vector.broadcast %144 : vector<16x1xf32> to vector<16x128xf32>
    %153 = arith.subf %138, %152 : vector<16x128xf32>
    %cst_59 = arith.constant 9.99999974E-6 : f32
    %154 = vector.broadcast %cst_59 : f32 to vector<16x1xf32>
    %155 = arith.addf %151, %154 : vector<16x1xf32>
    %156 = math.rsqrt %155 : vector<16x1xf32>
    %157 = vector.broadcast %156 : vector<16x1xf32> to vector<16x128xf32>
    %158 = arith.mulf %153, %157 : vector<16x128xf32>
    %159 = vector.broadcast %139 : vector<1x128xf32> to vector<16x128xf32>
    %160 = arith.mulf %158, %159 : vector<16x128xf32>
    %161 = vector.broadcast %140 : vector<1x128xf32> to vector<16x128xf32>
    %162 = arith.addf %160, %161 : vector<16x128xf32>
    %163 = vector.shape_cast %162 : vector<16x128xf32> to vector<2x8x128xf32>
    %cst_60 = arith.constant dense<0.000000e+00> : vector<8x128xf32>
    %164 = vector.multi_reduction <add>, %163, %cst_60 [0] : vector<2x8x128xf32> to vector<8x128xf32>
    %165 = vector.shape_cast %164 : vector<8x128xf32> to vector<1x8x128xf32>
    %c0_61 = arith.constant 0 : index
    %c0_62 = arith.constant 0 : index
    %c0_63 = arith.constant 0 : index
    %166 = vector.load %arg14[%c0_61, %c0_62, %c0_63] : memref<1x8x128xf32, #tpu.memory_space<vmem>>, vector<1x8x128xf32>
    tpu.vector_store %arg14[%c0_61, %c0_62, %c0_63], %165 {strides = array<i32>} : memref<1x8x128xf32, #tpu.memory_space<vmem>>, vector<1x8x128xf32>,
    return
  }
  func.func @transform_0(%arg0: i32) -> (i32, i32, i32) {
    %c0_i32 = arith.constant 0 : i32
    %c0_i32_0 = arith.constant 0 : i32
    %c0_i32_1 = arith.constant 0 : i32
    return %arg0, %c0_i32, %c0_i32_0 : i32, i32, i32
  }
  func.func @transform_1(%arg0: i32) -> (i32, i32) {
    %c0_i32 = arith.constant 0 : i32
    %c0_i32_0 = arith.constant 0 : i32
    %c0_i32_1 = arith.constant 0 : i32
    return %c0_i32, %c0_i32_0 : i32, i32
  }
  func.func @transform_2(%arg0: i32) -> (i32, i32) {
    %c0_i32 = arith.constant 0 : i32
    %c0_i32_0 = arith.constant 0 : i32
    %c0_i32_1 = arith.constant 0 : i32
    return %c0_i32, %c0_i32_0 : i32, i32
  }
  func.func @transform_3(%arg0: i32) -> (i32, i32) {
    %c0_i32 = arith.constant 0 : i32
    %c0_i32_0 = arith.constant 0 : i32
    %c0_i32_1 = arith.constant 0 : i32
    return %c0_i32, %c0_i32_0 : i32, i32
  }
  func.func @transform_4(%arg0: i32) -> (i32, i32) {
    %c0_i32 = arith.constant 0 : i32
    %c0_i32_0 = arith.constant 0 : i32
    %c0_i32_1 = arith.constant 0 : i32
    return %c0_i32, %c0_i32_0 : i32, i32
  }
  func.func @transform_5(%arg0: i32) -> (i32, i32) {
    %c0_i32 = arith.constant 0 : i32
    %c0_i32_0 = arith.constant 0 : i32
    %c0_i32_1 = arith.constant 0 : i32
    return %c0_i32, %c0_i32_0 : i32, i32
  }
  func.func @transform_6(%arg0: i32) -> (i32, i32) {
    %c0_i32 = arith.constant 0 : i32
    %c0_i32_0 = arith.constant 0 : i32
    %c0_i32_1 = arith.constant 0 : i32
    return %c0_i32, %c0_i32_0 : i32, i32
  }
  func.func @transform_7(%arg0: i32) -> (i32, i32) {
    %c0_i32 = arith.constant 0 : i32
    %c0_i32_0 = arith.constant 0 : i32
    %c0_i32_1 = arith.constant 0 : i32
    return %c0_i32, %c0_i32_0 : i32, i32
  }
  func.func @transform_8(%arg0: i32) -> (i32, i32) {
    %c0_i32 = arith.constant 0 : i32
    %c0_i32_0 = arith.constant 0 : i32
    %c0_i32_1 = arith.constant 0 : i32
    return %c0_i32, %c0_i32_0 : i32, i32
  }
  func.func @transform_9(%arg0: i32) -> (i32, i32) {
    %c0_i32 = arith.constant 0 : i32
    %c0_i32_0 = arith.constant 0 : i32
    %c0_i32_1 = arith.constant 0 : i32
    return %c0_i32, %c0_i32_0 : i32, i32
  }
  func.func @transform_10(%arg0: i32) -> (i32, i32) {
    %c0_i32 = arith.constant 0 : i32
    %c0_i32_0 = arith.constant 0 : i32
    %c0_i32_1 = arith.constant 0 : i32
    return %c0_i32, %c0_i32_0 : i32, i32
  }
  func.func @transform_11(%arg0: i32) -> (i32, i32) {
    %c0_i32 = arith.constant 0 : i32
    %c0_i32_0 = arith.constant 0 : i32
    %c0_i32_1 = arith.constant 0 : i32
    return %c0_i32, %c0_i32_0 : i32, i32
  }
  func.func @transform_12(%arg0: i32) -> (i32, i32) {
    %c0_i32 = arith.constant 0 : i32
    %c0_i32_0 = arith.constant 0 : i32
    %c0_i32_1 = arith.constant 0 : i32
    return %c0_i32, %c0_i32_0 : i32, i32
  }
  func.func @transform_13(%arg0: i32) -> (i32, i32, i32) {
    %c0_i32 = arith.constant 0 : i32
    %c0_i32_0 = arith.constant 0 : i32
    %c0_i32_1 = arith.constant 0 : i32
    return %arg0, %c0_i32, %c0_i32_0 : i32, i32, i32
  }
}

</mosaic_0001>

<llo_original>
// kernel: transformer_classifier.1
$region0: #{transformer_classifier.1}
  #allocation0 [shape = 'u32[]', space=smem, size = 0x4, offset = 0x4, fixed_abs, tag = 'smem constant byte address 0x4 - core index']
  #allocation1 [shape = 'u32[144,128]{1,0:T(1,128)}', space=vmem, size = 0x12000, scoped, tag = 'internal scratch']
  %s0 = inlined_call_operand.hbm [shape: f32[2,8,128], index: 0, kind: input, shape index: {}]
  %s1 = inlined_call_operand.hbm [shape: bf16[128,384], index: 1, kind: input, shape index: {}]
  %s2 = inlined_call_operand.hbm [shape: f32[1,384], index: 2, kind: input, shape index: {}]
  %s3 = inlined_call_operand.hbm [shape: bf16[128,128], index: 3, kind: input, shape index: {}]
  %s4 = inlined_call_operand.hbm [shape: f32[1,128], index: 4, kind: input, shape index: {}]
  %s5 = inlined_call_operand.hbm [shape: f32[1,128], index: 5, kind: input, shape index: {}]
  %s6 = inlined_call_operand.hbm [shape: f32[1,128], index: 6, kind: input, shape index: {}]
  %s7 = inlined_call_operand.hbm [shape: bf16[128,256], index: 7, kind: input, shape index: {}]
  %s8 = inlined_call_operand.hbm [shape: f32[1,256], index: 8, kind: input, shape index: {}]
  %s9 = inlined_call_operand.hbm [shape: bf16[256,128], index: 9, kind: input, shape index: {}]
  %s10 = inlined_call_operand.hbm [shape: f32[1,128], index: 10, kind: input, shape index: {}]
  %s11 = inlined_call_operand.hbm [shape: f32[1,128], index: 11, kind: input, shape index: {}]
  %s12 = inlined_call_operand.hbm [shape: f32[1,128], index: 12, kind: input, shape index: {}]
  %s13 = inlined_call_operand.hbm [shape: f32[1,8,128], index: 13, kind: output, shape index: {}]
  %s14 = sld [smem:[#allocation0]]
  $region114: #{transformer_classifier.1} parent=0
    _
  %s16 = ssub.s32 1, %s14
  %s17 = scalar_select 0, %s16, %s14
  $region1: #{transformer_classifier.1} parent=0
    #allocation2 [shape = 'u8[8192]{0}', space=vmem, size = 0x2000, scoped, tag = 'input window, operand 0, single buffered']
    #allocation3 [shape = 's32[1]{0}', space=sflag, size = 0x4, scoped, tag = 'scoped memory for transformer_classifier.1']
    #allocation4 [shape = 's32[1]{0}', space=sflag, size = 0x4, scoped, tag = 'scoped memory for transformer_classifier.1']
    #allocation5 [shape = 'u8[98304]{0}', space=vmem, size = 0x18000, scoped, tag = 'input window, operand 1, single buffered']
    #allocation6 [shape = 's32[1]{0}', space=sflag, size = 0x4, scoped, tag = 'scoped memory for transformer_classifier.1']
    #allocation7 [shape = 'u8[1536]{0}', space=vmem, size = 0x800, scoped, tag = 'input window, operand 2, single buffered']
    #allocation8 [shape = 'u8[32768]{0}', space=vmem, size = 0x8000, scoped, tag = 'input window, operand 3, single buffered']
    #allocation9 [shape = 's32[1]{0}', space=sflag, size = 0x4, scoped, tag = 'scoped memory for transformer_classifier.1']
    #allocation10 [shape = 'u8[512]{0}', space=vmem, size = 0x400, scoped, tag = 'input window, operand 4, single buffered']
    #allocation11 [shape = 'u8[512]{0}', space=vmem, size = 0x400, scoped, tag = 'input window, operand 5, single buffered']
    #allocation12 [shape = 's32[1]{0}', space=sflag, size = 0x4, scoped, tag = 'scoped memory for transformer_classifier.1']
    #allocation13 [shape = 'u8[512]{0}', space=vmem, size = 0x400, scoped, tag = 'input window, operand 6, single buffered']
    #allocation14 [shape = 'u8[65536]{0}', space=vmem, size = 0x10000, scoped, tag = 'input window, operand 7, single buffered']
    #allocation15 [shape = 's32[1]{0}', space=sflag, size = 0x4, scoped, tag = 'scoped memory for transformer_classifier.1']
    #allocation16 [shape = 'u8[1024]{0}', space=vmem, size = 0x400, scoped, tag = 'input window, operand 8, single buffered']
    #allocation17 [shape = 'u8[65536]{0}', space=vmem, size = 0x10000, scoped, tag = 'input window, operand 9, single buffered']
    #allocation18 [shape = 's32[1]{0}', space=sflag, size = 0x4, scoped, tag = 'scoped memory for transformer_classifier.1']
    #allocation19 [shape = 'u8[512]{0}', space=vmem, size = 0x400, scoped, tag = 'input window, operand 10, single buffered']
    #allocation20 [shape = 'u8[512]{0}', space=vmem, size = 0x400, scoped, tag = 'input window, operand 11, single buffered']
    #allocation21 [shape = 's32[1]{0}', space=sflag, size = 0x4, scoped, tag = 'scoped memory for transformer_classifier.1']
    #allocation22 [shape = 'u8[512]{0}', space=vmem, size = 0x400, scoped, tag = 'input window, operand 12, single buffered']
    #allocation23 [shape = 'u8[4096]{0}', space=vmem, size = 0x1000, scoped, tag = 'output window, operand 0, single buffered']
    %18 = vsyncpa [#allocation3], 0
    %19 = vsyncpa [#allocation6], 0
    %20 = vsyncpa [#allocation9], 0
    %21 = vsyncpa [#allocation12], 0
    %22 = vsyncpa [#allocation15], 0
    %23 = vsyncpa [#allocation18], 0
    %24 = vsyncpa [#allocation21], 0
    %25 = vsyncpa [#allocation4], 0
    // Predicated region
    $region2: #{transformer_classifier.1} parent=1 // pred_check
      _
    $region3: #{transformer_classifier.1} parent=1 // pred_check_branch
      %27 = sbr.rel (0) target = $region5
    $region4: #{transformer_classifier.1} parent=1 // pred_region
      %s29 = ssub.s32 256, 256
      %30 = vsyncadd [#allocation3], %s29
      %s31 = sshll.u32 [#allocation2], 4
      %s32 = int_to_ptr.vmem [resolvable:$true] %s31
      %37 = dma.hbm_to_vmem [thread:$0]  %s0, 256, %s32, [#allocation3], 128, 128, 8
    $region5: #{transformer_classifier.1} parent=1 // pred_fallthru
      _
    // Predicated region
    $region6: #{transformer_classifier.1} parent=1 // pred_check
      _
    $region7: #{transformer_classifier.1} parent=1 // pred_check_branch
      %39 = sbr.rel (0) target = $region9
    $region8: #{transformer_classifier.1} parent=1 // pred_region
      %s41 = ssub.s32 3072, 3072
      %42 = vsyncadd [#allocation6], %s41
      %s43 = sshll.u32 [#allocation5], 4
      %s44 = int_to_ptr.vmem [resolvable:$true] %s43
      %49 = dma.hbm_to_vmem [thread:$0]  %s1, 3072, %s44, [#allocation6], 192, 192, 12
    $region9: #{transformer_classifier.1} parent=1 // pred_fallthru
      _
    // Predicated region
    $region10: #{transformer_classifier.1} parent=1 // pred_check
      _
    $region11: #{transformer_classifier.1} parent=1 // pred_check_branch
      %51 = sbr.rel (0) target = $region13
    $region12: #{transformer_classifier.1} parent=1 // pred_region
      %s53 = ssub.s32 48, 48
      %54 = vsyncadd [#allocation6], %s53
      %s56 = sshll.u32 [#allocation7], 4
      %s57 = int_to_ptr.vmem [resolvable:$true] %s56
      %59 = dma.hbm_to_vmem [thread:$0]  %s2, 48, %s57, [#allocation6]
    $region13: #{transformer_classifier.1} parent=1 // pred_fallthru
      _
    // Predicated region
    $region14: #{transformer_classifier.1} parent=1 // pred_check
      _
    $region15: #{transformer_classifier.1} parent=1 // pred_check_branch
      %61 = sbr.rel (0) target = $region17
    $region16: #{transformer_classifier.1} parent=1 // pred_region
      %s63 = ssub.s32 1024, 1024
      %64 = vsyncadd [#allocation9], %s63
      %s65 = sshll.u32 [#allocation8], 4
      %s66 = int_to_ptr.vmem [resolvable:$true] %s65
      %71 = dma.hbm_to_vmem [thread:$0]  %s3, 1024, %s66, [#allocation9], 64, 64, 4
    $region17: #{transformer_classifier.1} parent=1 // pred_fallthru
      _
    // Predicated region
    $region18: #{transformer_classifier.1} parent=1 // pred_check
      _
    $region19: #{transformer_classifier.1} parent=1 // pred_check_branch
      %73 = sbr.rel (0) target = $region21
    $region20: #{transformer_classifier.1} parent=1 // pred_region
      %s75 = ssub.s32 16, 16
      %76 = vsyncadd [#allocation9], %s75
      %s78 = sshll.u32 [#allocation10], 4
      %s79 = int_to_ptr.vmem [resolvable:$true] %s78
      %81 = dma.hbm_to_vmem [thread:$0]  %s4, 16, %s79, [#allocation9]
    $region21: #{transformer_classifier.1} parent=1 // pred_fallthru
      _
    // Predicated region
    $region22: #{transformer_classifier.1} parent=1 // pred_check
      _
    $region23: #{transformer_classifier.1} parent=1 // pred_check_branch
      %83 = sbr.rel (0) target = $region25
    $region24: #{transformer_classifier.1} parent=1 // pred_region
      %s85 = ssub.s32 16, 16
      %86 = vsyncadd [#allocation12], %s85
      %s88 = sshll.u32 [#allocation11], 4
      %s89 = int_to_ptr.vmem [resolvable:$true] %s88
      %91 = dma.hbm_to_vmem [thread:$0]  %s5, 16, %s89, [#allocation12]
    $region25: #{transformer_classifier.1} parent=1 // pred_fallthru
      _
    // Predicated region
    $region26: #{transformer_classifier.1} parent=1 // pred_check
      _
    $region27: #{transformer_classifier.1} parent=1 // pred_check_branch
      %93 = sbr.rel (0) target = $region29
    $region28: #{transformer_classifier.1} parent=1 // pred_region
      %s95 = ssub.s32 16, 16
      %96 = vsyncadd [#allocation12], %s95
      %s98 = sshll.u32 [#allocation13], 4
      %s99 = int_to_ptr.vmem [resolvable:$true] %s98
      %101 = dma.hbm_to_vmem [thread:$0]  %s6, 16, %s99, [#allocation12]
    $region29: #{transformer_classifier.1} parent=1 // pred_fallthru
      _
    // Predicated region
    $region30: #{transformer_classifier.1} parent=1 // pred_check
      _
    $region31: #{transformer_classifier.1} parent=1 // pred_check_branch
      %103 = sbr.rel (0) target = $region33
    $region32: #{transformer_classifier.1} parent=1 // pred_region
      %s105 = ssub.s32 2048, 2048
      %106 = vsyncadd [#allocation15], %s105
      %s107 = sshll.u32 [#allocation14], 4
      %s108 = int_to_ptr.vmem [resolvable:$true] %s107
      %113 = dma.hbm_to_vmem [thread:$0]  %s7, 2048, %s108, [#allocation15], 128, 128, 8
    $region33: #{transformer_classifier.1} parent=1 // pred_fallthru
      _
    // Predicated region
    $region34: #{transformer_classifier.1} parent=1 // pred_check
      _
    $region35: #{transformer_classifier.1} parent=1 // pred_check_branch
      %115 = sbr.rel (0) target = $region37
    $region36: #{transformer_classifier.1} parent=1 // pred_region
      %s117 = ssub.s32 32, 32
      %118 = vsyncadd [#allocation15], %s117
      %s120 = sshll.u32 [#allocation16], 4
      %s121 = int_to_ptr.vmem [resolvable:$true] %s120
      %123 = dma.hbm_to_vmem [thread:$0]  %s8, 32, %s121, [#allocation15]
    $region37: #{transformer_classifier.1} parent=1 // pred_fallthru
      _
    // Predicated region
    $region38: #{transformer_classifier.1} parent=1 // pred_check
      _
    $region39: #{transformer_classifier.1} parent=1 // pred_check_branch
      %125 = sbr.rel (0) target = $region41
    $region40: #{transformer_classifier.1} parent=1 // pred_region
      %s127 = ssub.s32 2048, 2048
      %128 = vsyncadd [#allocation18], %s127
      %s129 = sshll.u32 [#allocation17], 4
      %s130 = int_to_ptr.vmem [resolvable:$true] %s129
      %135 = dma.hbm_to_vmem [thread:$0]  %s9, 2048, %s130, [#allocation18], 64, 64, 4
    $region41: #{transformer_classifier.1} parent=1 // pred_fallthru
      _
    // Predicated region
    $region42: #{transformer_classifier.1} parent=1 // pred_check
      _
    $region43: #{transformer_classifier.1} parent=1 // pred_check_branch
      %137 = sbr.rel (0) target = $region45
    $region44: #{transformer_classifier.1} parent=1 // pred_region
      %s139 = ssub.s32 16, 16
      %140 = vsyncadd [#allocation18], %s139
      %s142 = sshll.u32 [#allocation19], 4
      %s143 = int_to_ptr.vmem [resolvable:$true] %s142
      %145 = dma.hbm_to_vmem [thread:$0]  %s10, 16, %s143, [#allocation18]
    $region45: #{transformer_classifier.1} parent=1 // pred_fallthru
      _
    // Predicated region
    $region46: #{transformer_classifier.1} parent=1 // pred_check
      _
    $region47: #{transformer_classifier.1} parent=1 // pred_check_branch
      %147 = sbr.rel (0) target = $region49
    $region48: #{transformer_classifier.1} parent=1 // pred_region
      %s149 = ssub.s32 16, 16
      %150 = vsyncadd [#allocation21], %s149
      %s152 = sshll.u32 [#allocation20], 4
      %s153 = int_to_ptr.vmem [resolvable:$true] %s152
      %155 = dma.hbm_to_vmem [thread:$0]  %s11, 16, %s153, [#allocation21]
    $region49: #{transformer_classifier.1} parent=1 // pred_fallthru
      _
    // Predicated region
    $region50: #{transformer_classifier.1} parent=1 // pred_check
      _
    $region51: #{transformer_classifier.1} parent=1 // pred_check_branch
      %157 = sbr.rel (0) target = $region53
    $region52: #{transformer_classifier.1} parent=1 // pred_region
      %s159 = ssub.s32 16, 16
      %160 = vsyncadd [#allocation21], %s159
      %s162 = sshll.u32 [#allocation22], 4
      %s163 = int_to_ptr.vmem [resolvable:$true] %s162
      %165 = dma.hbm_to_vmem [thread:$0]  %s12, 16, %s163, [#allocation21]
    $region53: #{transformer_classifier.1} parent=1 // pred_fallthru
      _
    // Predicated region
    $region54: #{transformer_classifier.1} parent=1 // pred_check
      _
    $region55: #{transformer_classifier.1} parent=1 // pred_check_branch
      %167 = sbr.rel (0) target = $region57
    $region56: #{transformer_classifier.1} parent=1 // pred_region
      %168 = dma.done [#allocation3], 256
    $region57: #{transformer_classifier.1} parent=1 // pred_fallthru
      _
    // Predicated region
    $region58: #{transformer_classifier.1} parent=1 // pred_check
      _
    $region59: #{transformer_classifier.1} parent=1 // pred_check_branch
      %170 = sbr.rel (0) target = $region61
    $region60: #{transformer_classifier.1} parent=1 // pred_region
      %171 = dma.done [#allocation6], 3072
    $region61: #{transformer_classifier.1} parent=1 // pred_fallthru
      _
    // Predicated region
    $region62: #{transformer_classifier.1} parent=1 // pred_check
      _
    $region63: #{transformer_classifier.1} parent=1 // pred_check_branch
      %173 = sbr.rel (0) target = $region65
    $region64: #{transformer_classifier.1} parent=1 // pred_region
      %174 = dma.done [#allocation6], 48
    $region65: #{transformer_classifier.1} parent=1 // pred_fallthru
      _
    // Predicated region
    $region66: #{transformer_classifier.1} parent=1 // pred_check
      _
    $region67: #{transformer_classifier.1} parent=1 // pred_check_branch
      %176 = sbr.rel (0) target = $region69
    $region68: #{transformer_classifier.1} parent=1 // pred_region
      %177 = dma.done [#allocation9], 1024
    $region69: #{transformer_classifier.1} parent=1 // pred_fallthru
      _
    // Predicated region
    $region70: #{transformer_classifier.1} parent=1 // pred_check
      _
    $region71: #{transformer_classifier.1} parent=1 // pred_check_branch
      %179 = sbr.rel (0) target = $region73
    $region72: #{transformer_classifier.1} parent=1 // pred_region
      %180 = dma.done [#allocation9], 16
    $region73: #{transformer_classifier.1} parent=1 // pred_fallthru
      _
    // Predicated region
    $region74: #{transformer_classifier.1} parent=1 // pred_check
      _
    $region75: #{transformer_classifier.1} parent=1 // pred_check_branch
      %182 = sbr.rel (0) target = $region77
    $region76: #{transformer_classifier.1} parent=1 // pred_region
      %183 = dma.done [#allocation12], 16
    $region77: #{transformer_classifier.1} parent=1 // pred_fallthru
      _
    // Predicated region
    $region78: #{transformer_classifier.1} parent=1 // pred_check
      _
    $region79: #{transformer_classifier.1} parent=1 // pred_check_branch
      %185 = sbr.rel (0) target = $region81
    $region80: #{transformer_classifier.1} parent=1 // pred_region
      %186 = dma.done [#allocation12], 16
    $region81: #{transformer_classifier.1} parent=1 // pred_fallthru
      _
    // Predicated region
    $region82: #{transformer_classifier.1} parent=1 // pred_check
      _
    $region83: #{transformer_classifier.1} parent=1 // pred_check_branch
      %188 = sbr.rel (0) target = $region85
    $region84: #{transformer_classifier.1} parent=1 // pred_region
      %189 = dma.done [#allocation15], 2048
    $region85: #{transformer_classifier.1} parent=1 // pred_fallthru
      _
    // Predicated region
    $region86: #{transformer_classifier.1} parent=1 // pred_check
      _
    $region87: #{transformer_classifier.1} parent=1 // pred_check_branch
      %191 = sbr.rel (0) target = $region89
    $region88: #{transformer_classifier.1} parent=1 // pred_region
      %192 = dma.done [#allocation15], 32
    $region89: #{transformer_classifier.1} parent=1 // pred_fallthru
      _
    // Predicated region
    $region90: #{transformer_classifier.1} parent=1 // pred_check
      _
    $region91: #{transformer_classifier.1} parent=1 // pred_check_branch
      %194 = sbr.rel (0) target = $region93
    $region92: #{transformer_classifier.1} parent=1 // pred_region
      %195 = dma.done [#allocation18], 2048
    $region93: #{transformer_classifier.1} parent=1 // pred_fallthru
      _
    // Predicated region
    $region94: #{transformer_classifier.1} parent=1 // pred_check
      _
    $region95: #{transformer_classifier.1} parent=1 // pred_check_branch
      %197 = sbr.rel (0) target = $region97
    $region96: #{transformer_classifier.1} parent=1 // pred_region
      %198 = dma.done [#allocation18], 16
    $region97: #{transformer_classifier.1} parent=1 // pred_fallthru
      _
    // Predicated region
    $region98: #{transformer_classifier.1} parent=1 // pred_check
      _
    $region99: #{transformer_classifier.1} parent=1 // pred_check_branch
      %200 = sbr.rel (0) target = $region101
    $region100: #{transformer_classifier.1} parent=1 // pred_region
      %201 = dma.done [#allocation21], 16
    $region101: #{transformer_classifier.1} parent=1 // pred_fallthru
      _
    // Predicated region
    $region102: #{transformer_classifier.1} parent=1 // pred_check
      _
    $region103: #{transformer_classifier.1} parent=1 // pred_check_branch
      %203 = sbr.rel (0) target = $region105
    $region104: #{transformer_classifier.1} parent=1 // pred_region
      %204 = dma.done [#allocation21], 16
    $region105: #{transformer_classifier.1} parent=1 // pred_fallthru
      _
    %v206 = vld [vmem:[#allocation2] sm:$0xff]
    %v207 = vld [vmem:[#allocation2 + $0x8] sm:$0xff]
    %v208 = vpack.c.bf16 %v207, %v206
    %v209 = vld [vmem:[#allocation5] sm:$0xff]
    %v210 = vld [vmem:[#allocation5 + $0x8] sm:$0xf]
    %v211 = vld [vmem:[#allocation5 + $0xc] sm:$0xff]
    %v212 = vld [vmem:[#allocation5 + $0x14] sm:$0xf]
    %v213 = vld [vmem:[#allocation5 + $0x18] sm:$0xff]
    %v214 = vld [vmem:[#allocation5 + $0x20] sm:$0xf]
    %v215 = vld [vmem:[#allocation5 + $0x24] sm:$0xff]
    %v216 = vld [vmem:[#allocation5 + $0x2c] sm:$0xf]
    %v217 = vld [vmem:[#allocation5 + $0x30] sm:$0xff]
    %v218 = vld [vmem:[#allocation5 + $0x38] sm:$0xf]
    %v219 = vld [vmem:[#allocation5 + $0x3c] sm:$0xff]
    %v220 = vld [vmem:[#allocation5 + $0x44] sm:$0xf]
    %v221 = vld [vmem:[#allocation5 + $0x48] sm:$0xff]
    %v222 = vld [vmem:[#allocation5 + $0x50] sm:$0xf]
    %v223 = vld [vmem:[#allocation5 + $0x54] sm:$0xff]
    %v224 = vld [vmem:[#allocation5 + $0x5c] sm:$0xf]
    %v225 = vld [vmem:[#allocation5 + $0x60] sm:$0xff]
    %v226 = vld [vmem:[#allocation5 + $0x68] sm:$0xf]
    %v227 = vld [vmem:[#allocation5 + $0x6c] sm:$0xff]
    %v228 = vld [vmem:[#allocation5 + $0x74] sm:$0xf]
    %v229 = vld [vmem:[#allocation5 + $0x78] sm:$0xff]
    %v230 = vld [vmem:[#allocation5 + $0x80] sm:$0xf]
    %v231 = vld [vmem:[#allocation5 + $0x84] sm:$0xff]
    %v232 = vld [vmem:[#allocation5 + $0x8c] sm:$0xf]
    %v233 = vld [vmem:[#allocation5 + $0x90] sm:$0xff]
    %v234 = vld [vmem:[#allocation5 + $0x98] sm:$0xf]
    %v235 = vld [vmem:[#allocation5 + $0x9c] sm:$0xff]
    %v236 = vld [vmem:[#allocation5 + $0xa4] sm:$0xf]
    %v237 = vld [vmem:[#allocation5 + $0xa8] sm:$0xff]
    %v238 = vld [vmem:[#allocation5 + $0xb0] sm:$0xf]
    %v239 = vld [vmem:[#allocation5 + $0xb4] sm:$0xff]
    %v240 = vld [vmem:[#allocation5 + $0xbc] sm:$0xf]
    %v241 = vld [vmem:[#allocation7] sm:$0x7]
    %v243 = vlaneseq
    %v244 = vshrl.u32 %v243, 7
    %v245 = vsub.s32 0, %v244
    %v246 = vrot.slane %v241, %v245
    %v247 = vlaneseq
    %v248 = vshrl.u32 %v247, 7
    %v249 = vsub.s32 1, %v248
    %v250 = vrot.slane %v241, %v249
    %v251 = vlaneseq
    %v252 = vshrl.u32 %v251, 7
    %v253 = vsub.s32 2, %v252
    %v254 = vrot.slane %v241, %v253
    %v290 = vunpack.c.l.b16 %v209
    %v291 = vunpack.c.h.b16 %v209
    %v292 = vunpack.c.l.b16 %v210
    %v293 = vunpack.c.l.b16 %v211
    %v294 = vunpack.c.h.b16 %v211
    %v295 = vunpack.c.l.b16 %v212
    %v296 = vunpack.c.l.b16 %v213
    %v297 = vunpack.c.h.b16 %v213
    %v298 = vunpack.c.l.b16 %v214
    %v299 = vunpack.c.l.b16 %v215
    %v300 = vunpack.c.h.b16 %v215
    %v301 = vunpack.c.l.b16 %v216
    %v302 = vunpack.c.l.b16 %v217
    %v303 = vunpack.c.h.b16 %v217
    %v304 = vunpack.c.l.b16 %v218
    %v305 = vunpack.c.l.b16 %v219
    %v306 = vunpack.c.h.b16 %v219
    %v307 = vunpack.c.l.b16 %v220
    %v308 = vunpack.c.l.b16 %v221
    %v309 = vunpack.c.h.b16 %v221
    %v310 = vunpack.c.l.b16 %v222
    %v311 = vunpack.c.l.b16 %v223
    %v312 = vunpack.c.h.b16 %v223
    %v313 = vunpack.c.l.b16 %v224
    %v314 = vunpack.c.l.b16 %v225
    %v315 = vunpack.c.h.b16 %v225
    %v316 = vunpack.c.l.b16 %v226
    %v317 = vunpack.c.l.b16 %v227
    %v318 = vunpack.c.h.b16 %v227
    %v319 = vunpack.c.l.b16 %v228
    %v320 = vunpack.c.l.b16 %v229
    %v321 = vunpack.c.h.b16 %v229
    %v322 = vunpack.c.l.b16 %v230
    %v323 = vunpack.c.l.b16 %v231
    %v324 = vunpack.c.h.b16 %v231
    %v325 = vunpack.c.l.b16 %v232
    %v326 = vunpack.c.l.b16 %v233
    %v327 = vunpack.c.h.b16 %v233
    %v328 = vunpack.c.l.b16 %v234
    %v329 = vunpack.c.l.b16 %v235
    %v330 = vunpack.c.h.b16 %v235
    %v331 = vunpack.c.l.b16 %v236
    %v332 = vunpack.c.l.b16 %v237
    %v333 = vunpack.c.h.b16 %v237
    %v334 = vunpack.c.l.b16 %v238
    %v335 = vunpack.c.l.b16 %v239
    %v336 = vunpack.c.h.b16 %v239
    %v337 = vunpack.c.l.b16 %v240
    %v338 = vpack.c.b16 %v293, %v290
    %v339 = vpack.c.b16 %v294, %v291
    %v340 = vpack.c.b16 %v295, %v292
    %v341 = vpack.c.b16 %v299, %v296
    %v342 = vpack.c.b16 %v300, %v297
    %v343 = vpack.c.b16 %v301, %v298
    %v344 = vpack.c.b16 %v305, %v302
    %v345 = vpack.c.b16 %v306, %v303
    %v346 = vpack.c.b16 %v307, %v304
    %v347 = vpack.c.b16 %v311, %v308
    %v348 = vpack.c.b16 %v312, %v309
    %v349 = vpack.c.b16 %v313, %v310
    %v350 = vpack.c.b16 %v317, %v314
    %v351 = vpack.c.b16 %v318, %v315
    %v352 = vpack.c.b16 %v319, %v316
    %v353 = vpack.c.b16 %v323, %v320
    %v354 = vpack.c.b16 %v324, %v321
    %v355 = vpack.c.b16 %v325, %v322
    %v356 = vpack.c.b16 %v329, %v326
    %v357 = vpack.c.b16 %v330, %v327
    %v358 = vpack.c.b16 %v331, %v328
    %v359 = vpack.c.b16 %v335, %v332
    %v360 = vpack.c.b16 %v336, %v333
    %v361 = vpack.c.b16 %v337, %v334
    %386 = vmatprep.subr.bf16.mxu0 %v339
    %387 = vmatpush1.bf16.msra.mxu0 %v338
    %388 = vmatprep.subr.bf16.mxu0 %v342
    %389 = vmatpush1.bf16.msra.mxu0 %v341
    %390 = vmatprep.subr.bf16.mxu0 %v345
    %391 = vmatpush1.bf16.msra.mxu0 %v344
    %392 = vmatprep.subr.bf16.mxu0 %v348
    %393 = vmatpush1.bf16.msra.mxu0 %v347
    %394 = vmatprep.subr.bf16.mxu0 %v351
    %395 = vmatpush1.bf16.msra.mxu0 %v350
    %396 = vmatprep.subr.bf16.mxu0 %v354
    %397 = vmatpush1.bf16.msra.mxu0 %v353
    %398 = vmatprep.subr.bf16.mxu0 %v357
    %399 = vmatpush1.bf16.msra.mxu0 %v356
    %400 = vmatprep.subr.bf16.mxu0 %v360
    %401 = vmatpush1.bf16.msra.mxu0 %v359
    %402 = vmatprep.subr.bf16.mxu0 0
    %403 = vmatpush1.bf16.msra.mxu0 0
    %404 = vmatprep.subr.bf16.mxu0 0
    %405 = vmatpush1.bf16.msra.mxu0 0
    %406 = vmatprep.subr.bf16.mxu0 0
    %407 = vmatpush1.bf16.msra.mxu0 0
    %408 = vmatprep.subr.bf16.mxu0 0
    %409 = vmatpush1.bf16.msra.mxu0 0
    %410 = vmatprep.subr.bf16.mxu0 0
    %411 = vmatpush1.bf16.msra.mxu0 0
    %412 = vmatprep.subr.bf16.mxu0 0
    %413 = vmatpush1.bf16.msra.mxu0 0
    %414 = vmatprep.subr.bf16.mxu0 0
    %415 = vmatpush1.bf16.msra.mxu0 0
    %416 = vmatprep.subr.bf16.mxu0 0
    %417 = vmatpush1.bf16.msra.mxu0 0
    %418 = vmatprep.mubr.bf16.mxu0 0
    %419 = vmatmul.mubr.bf16.gmra.mrb[0].mxu0 %v208
    %v420 = vpop.f32.mrb[0].mxu0
    %v421 = vadd.f32 %v246, %v420
    %v422 = vpop.f32.mrb[0].mxu0
    %v423 = vadd.f32 %v250, %v422
    %v424 = vpop.f32.mrb[0].mxu0
    %v425 = vadd.f32 %v246, %v424
    %v426 = vpop.f32.mrb[0].mxu0
    %v427 = vadd.f32 %v250, %v426
    %428 = vdwg.mxu0
    %429 = vmatprep.subr.bf16.mxu0 0
    %430 = vmatpush1.bf16.msra.mxu0 %v340
    %431 = vmatprep.subr.bf16.mxu0 0
    %432 = vmatpush1.bf16.msra.mxu0 %v343
    %433 = vmatprep.subr.bf16.mxu0 0
    %434 = vmatpush1.bf16.msra.mxu0 %v346
    %435 = vmatprep.subr.bf16.mxu0 0
    %436 = vmatpush1.bf16.msra.mxu0 %v349
    %437 = vmatprep.subr.bf16.mxu0 0
    %438 = vmatpush1.bf16.msra.mxu0 %v352
    %439 = vmatprep.subr.bf16.mxu0 0
    %440 = vmatpush1.bf16.msra.mxu0 %v355
    %441 = vmatprep.subr.bf16.mxu0 0
    %442 = vmatpush1.bf16.msra.mxu0 %v358
    %443 = vmatprep.subr.bf16.mxu0 0
    %444 = vmatpush1.bf16.msra.mxu0 %v361
    %445 = vmatprep.subr.bf16.mxu0 0
    %446 = vmatpush1.bf16.msra.mxu0 0
    %447 = vmatprep.subr.bf16.mxu0 0
    %448 = vmatpush1.bf16.msra.mxu0 0
    %449 = vmatprep.subr.bf16.mxu0 0
    %450 = vmatpush1.bf16.msra.mxu0 0
    %451 = vmatprep.subr.bf16.mxu0 0
    %452 = vmatpush1.bf16.msra.mxu0 0
    %453 = vmatprep.subr.bf16.mxu0 0
    %454 = vmatpush1.bf16.msra.mxu0 0
    %455 = vmatprep.subr.bf16.mxu0 0
    %456 = vmatpush1.bf16.msra.mxu0 0
    %457 = vmatprep.subr.bf16.mxu0 0
    %458 = vmatpush1.bf16.msra.mxu0 0
    %459 = vmatprep.subr.bf16.mxu0 0
    %460 = vmatpush1.bf16.msra.mxu0 0
    %461 = vmatprep.mubr.bf16.mxu0 0
    %462 = vmatmul.mubr.bf16.gmra.mrb[0].mxu0 %v208
    %v463 = vpop.f32.mrb[0].mxu0
    %v464 = vadd.f32 %v254, %v463
    %v465 = vpop.f32.mrb[0].mxu0
    %v466 = vpop.f32.mrb[0].mxu0
    %v467 = vadd.f32 %v254, %v466
    %v468 = vpop.f32.mrb[0].mxu0
    %469 = vdwg.mxu0
    %vm470 = vcmask 261120
    %v472 = vsel %vm470, %v421, 0
    %v475 = vsel %vm470, %v423, 0
    %477 = vmatprep.subr.mxu0 0.0
    %478 = vmatpush1.xpose.msra.mxu0 %v475
    %479 = vmatprep.subr.mxu0 0.0
    %480 = vmatpush1.xpose.msra.mxu0 0.0
    %481 = vmatprep.subr.mxu0 0.0
    %482 = vmatpush1.xpose.msra.mxu0 0.0
    %483 = vmatprep.subr.mxu0 0.0
    %484 = vmatpush1.xpose.msra.mxu0 0.0
    %485 = vmatprep.subr.mxu0 0.0
    %486 = vmatpush1.xpose.msra.mxu0 0.0
    %487 = vmatprep.subr.mxu0 0.0
    %488 = vmatpush1.xpose.msra.mxu0 0.0
    %489 = vmatprep.subr.mxu0 0.0
    %490 = vmatpush1.xpose.msra.mxu0 0.0
    %491 = vmatprep.subr.mxu0 0.0
    %492 = vmatpush1.xpose.msra.mxu0 0.0
    %493 = vmatprep.subr.mxu0 0.0
    %494 = vmatpush1.xpose.msra.mxu0 0.0
    %495 = vmatprep.subr.mxu0 0.0
    %496 = vmatpush1.xpose.msra.mxu0 0.0
    %497 = vmatprep.subr.mxu0 0.0
    %498 = vmatpush1.xpose.msra.mxu0 0.0
    %499 = vmatprep.subr.mxu0 0.0
    %500 = vmatpush1.xpose.msra.mxu0 0.0
    %501 = vmatprep.subr.mxu0 0.0
    %502 = vmatpush1.xpose.msra.mxu0 0.0
    %503 = vmatprep.subr.mxu0 0.0
    %504 = vmatpush1.xpose.msra.mxu0 0.0
    %505 = vmatprep.subr.mxu0 0.0
    %506 = vmatpush1.xpose.msra.mxu0 0.0
    %507 = vmatprep.subr.mxu0 0.0
    %508 = vmatpush1.xpose.msra.mxu0 0.0
    %509 = vmatprep.subr.mxu0 0.0
    %510 = vmatpush1.xpose.msra.mxu0 0.0
    %511 = vmatprep.subr.mxu0 0.0
    %512 = vmatpush1.xpose.msra.mxu0 0.0
    %513 = vmatprep.subr.mxu0 0.0
    %514 = vmatpush1.xpose.msra.mxu0 0.0
    %515 = vmatprep.subr.mxu0 0.0
    %516 = vmatpush1.xpose.msra.mxu0 0.0
    %517 = vmatprep.subr.mxu0 0.0
    %518 = vmatpush1.xpose.msra.mxu0 0.0
    %519 = vmatprep.subr.mxu0 0.0
    %520 = vmatpush1.xpose.msra.mxu0 0.0
    %521 = vmatprep.subr.mxu0 0.0
    %522 = vmatpush1.xpose.msra.mxu0 0.0
    %523 = vmatprep.subr.mxu0 0.0
    %524 = vmatpush1.xpose.msra.mxu0 0.0
    %525 = vmatprep.subr.mxu0 0.0
    %526 = vmatpush1.xpose.msra.mxu0 0.0
    %527 = vmatprep.subr.mxu0 0.0
    %528 = vmatpush1.xpose.msra.mxu0 0.0
    %529 = vmatprep.subr.mxu0 0.0
    %530 = vmatpush1.xpose.msra.mxu0 0.0
    %531 = vmatprep.subr.mxu0 0.0
    %532 = vmatpush1.xpose.msra.mxu0 0.0
    %533 = vmatprep.subr.mxu0 0.0
    %534 = vmatpush1.xpose.msra.mxu0 0.0
    %535 = vmatprep.subr.mxu0 0.0
    %536 = vmatpush1.xpose.msra.mxu0 0.0
    %537 = vmatprep.subr.mxu0 0.0
    %538 = vmatpush1.xpose.msra.mxu0 0.0
    %539 = vmatprep.subr.mxu0 0.0
    %540 = vmatpush1.xpose.msra.mxu0 0.0
    %541 = vmatprep.mubr.f32.mxu0 0.0
    %542 = vmatmul.mubr.f32.gmra.mrb[0].mxu0 %v472
    %v543 = vpop.f32.mrb[0].mxu0
    %v544 = vadd.f32 0.0, %v543
    %v545 = vpop.f32.mrb[0].mxu0
    %546 = vdwg.mxu0
    %v548 = vsel %vm470, %v425, 0
    %v551 = vsel %vm470, %v427, 0
    %553 = vmatprep.subr.mxu0 0.0
    %554 = vmatpush1.xpose.msra.mxu0 %v551
    %555 = vmatprep.subr.mxu0 0.0
    %556 = vmatpush1.xpose.msra.mxu0 0.0
    %557 = vmatprep.subr.mxu0 0.0
    %558 = vmatpush1.xpose.msra.mxu0 0.0
    %559 = vmatprep.subr.mxu0 0.0
    %560 = vmatpush1.xpose.msra.mxu0 0.0
    %561 = vmatprep.subr.mxu0 0.0
    %562 = vmatpush1.xpose.msra.mxu0 0.0
    %563 = vmatprep.subr.mxu0 0.0
    %564 = vmatpush1.xpose.msra.mxu0 0.0
    %565 = vmatprep.subr.mxu0 0.0
    %566 = vmatpush1.xpose.msra.mxu0 0.0
    %567 = vmatprep.subr.mxu0 0.0
    %568 = vmatpush1.xpose.msra.mxu0 0.0
    %569 = vmatprep.subr.mxu0 0.0
    %570 = vmatpush1.xpose.msra.mxu0 0.0
    %571 = vmatprep.subr.mxu0 0.0
    %572 = vmatpush1.xpose.msra.mxu0 0.0
    %573 = vmatprep.subr.mxu0 0.0
    %574 = vmatpush1.xpose.msra.mxu0 0.0
    %575 = vmatprep.subr.mxu0 0.0
    %576 = vmatpush1.xpose.msra.mxu0 0.0
    %577 = vmatprep.subr.mxu0 0.0
    %578 = vmatpush1.xpose.msra.mxu0 0.0
    %579 = vmatprep.subr.mxu0 0.0
    %580 = vmatpush1.xpose.msra.mxu0 0.0
    %581 = vmatprep.subr.mxu0 0.0
    %582 = vmatpush1.xpose.msra.mxu0 0.0
    %583 = vmatprep.subr.mxu0 0.0
    %584 = vmatpush1.xpose.msra.mxu0 0.0
    %585 = vmatprep.subr.mxu0 0.0
    %586 = vmatpush1.xpose.msra.mxu0 0.0
    %587 = vmatprep.subr.mxu0 0.0
    %588 = vmatpush1.xpose.msra.mxu0 0.0
    %589 = vmatprep.subr.mxu0 0.0
    %590 = vmatpush1.xpose.msra.mxu0 0.0
    %591 = vmatprep.subr.mxu0 0.0
    %592 = vmatpush1.xpose.msra.mxu0 0.0
    %593 = vmatprep.subr.mxu0 0.0
    %594 = vmatpush1.xpose.msra.mxu0 0.0
    %595 = vmatprep.subr.mxu0 0.0
    %596 = vmatpush1.xpose.msra.mxu0 0.0
    %597 = vmatprep.subr.mxu0 0.0
    %598 = vmatpush1.xpose.msra.mxu0 0.0
    %599 = vmatprep.subr.mxu0 0.0
    %600 = vmatpush1.xpose.msra.mxu0 0.0
    %601 = vmatprep.subr.mxu0 0.0
    %602 = vmatpush1.xpose.msra.mxu0 0.0
    %603 = vmatprep.subr.mxu0 0.0
    %604 = vmatpush1.xpose.msra.mxu0 0.0
    %605 = vmatprep.subr.mxu0 0.0
    %606 = vmatpush1.xpose.msra.mxu0 0.0
    %607 = vmatprep.subr.mxu0 0.0
    %608 = vmatpush1.xpose.msra.mxu0 0.0
    %609 = vmatprep.subr.mxu0 0.0
    %610 = vmatpush1.xpose.msra.mxu0 0.0
    %611 = vmatprep.subr.mxu0 0.0
    %612 = vmatpush1.xpose.msra.mxu0 0.0
    %613 = vmatprep.subr.mxu0 0.0
    %614 = vmatpush1.xpose.msra.mxu0 0.0
    %615 = vmatprep.subr.mxu0 0.0
    %616 = vmatpush1.xpose.msra.mxu0 0.0
    %617 = vmatprep.mubr.f32.mxu0 0.0
    %618 = vmatmul.mubr.f32.gmra.mrb[0].mxu0 %v548
    %v619 = vpop.f32.mrb[0].mxu0
    %v620 = vadd.f32 0.0, %v619
    %v621 = vpop.f32.mrb[0].mxu0
    %622 = vdwg.mxu0
    %v623 = vmul.f32 %v544, 0.17677669
    %v624 = vmul.f32 %v620, 0.17677669
    %vm625 = vcmask 64512
    %v626 = vsel %vm625, %v623, -inf
    %627 = vmax.xlane.f32.xlu0 %v626
    %v628 = vpop.xlane.xlu0 %627
    %v629 = vsel %vm625, %v624, -inf
    %630 = vmax.xlane.f32.xlu0 %v629
    %v631 = vpop.xlane.xlu0 %630
    %v632 = vsub.f32 %v623, %v628
    %v633 = vsub.f32 %v624, %v631
    %v634 = vmul.f32 %v632, 1.442695
    %v635 = vpow.pop %v634
    %v636 = vmul.f32 %v633, 1.442695
    %v637 = vpow.pop %v636
    %v638 = vsel %vm625, %v635, 0.0
    %639 = vadd.xlane.f32.xlu0 %v638
    %v640 = vpop.xlane.xlu0 %639
    %v641 = vsel %vm625, %v637, 0.0
    %642 = vadd.xlane.f32.xlu0 %v641
    %v643 = vpop.xlane.xlu0 %642
    %v644 = vrcp.pop %v640
    %v645 = vrcp.pop %v643
    %v646 = vmul.f32 %v635, %v644
    %v647 = vmul.f32 %v637, %v645
    %v649 = vsel %vm625, %v646, 0
    %651 = vmatprep.subr.mxu0 0.0
    %652 = vmatpush1.msra.mxu0 %v464
    %653 = vmatprep.subr.mxu0 0.0
    %654 = vmatpush1.msra.mxu0 0.0
    %655 = vmatprep.subr.mxu0 0.0
    %656 = vmatpush1.msra.mxu0 0.0
    %657 = vmatprep.subr.mxu0 0.0
    %658 = vmatpush1.msra.mxu0 0.0
    %659 = vmatprep.subr.mxu0 0.0
    %660 = vmatpush1.msra.mxu0 0.0
    %661 = vmatprep.subr.mxu0 0.0
    %662 = vmatpush1.msra.mxu0 0.0
    %663 = vmatprep.subr.mxu0 0.0
    %664 = vmatpush1.msra.mxu0 0.0
    %665 = vmatprep.subr.mxu0 0.0
    %666 = vmatpush1.msra.mxu0 0.0
    %667 = vmatprep.subr.mxu0 0.0
    %668 = vmatpush1.msra.mxu0 0.0
    %669 = vmatprep.subr.mxu0 0.0
    %670 = vmatpush1.msra.mxu0 0.0
    %671 = vmatprep.subr.mxu0 0.0
    %672 = vmatpush1.msra.mxu0 0.0
    %673 = vmatprep.subr.mxu0 0.0
    %674 = vmatpush1.msra.mxu0 0.0
    %675 = vmatprep.subr.mxu0 0.0
    %676 = vmatpush1.msra.mxu0 0.0
    %677 = vmatprep.subr.mxu0 0.0
    %678 = vmatpush1.msra.mxu0 0.0
    %679 = vmatprep.subr.mxu0 0.0
    %680 = vmatpush1.msra.mxu0 0.0
    %681 = vmatprep.subr.mxu0 0.0
    %682 = vmatpush1.msra.mxu0 0.0
    %683 = vmatprep.subr.mxu0 0.0
    %684 = vmatpush1.msra.mxu0 0.0
    %685 = vmatprep.subr.mxu0 0.0
    %686 = vmatpush1.msra.mxu0 0.0
    %687 = vmatprep.subr.mxu0 0.0
    %688 = vmatpush1.msra.mxu0 0.0
    %689 = vmatprep.subr.mxu0 0.0
    %690 = vmatpush1.msra.mxu0 0.0
    %691 = vmatprep.subr.mxu0 0.0
    %692 = vmatpush1.msra.mxu0 0.0
    %693 = vmatprep.subr.mxu0 0.0
    %694 = vmatpush1.msra.mxu0 0.0
    %695 = vmatprep.subr.mxu0 0.0
    %696 = vmatpush1.msra.mxu0 0.0
    %697 = vmatprep.subr.mxu0 0.0
    %698 = vmatpush1.msra.mxu0 0.0
    %699 = vmatprep.subr.mxu0 0.0
    %700 = vmatpush1.msra.mxu0 0.0
    %701 = vmatprep.subr.mxu0 0.0
    %702 = vmatpush1.msra.mxu0 0.0
    %703 = vmatprep.subr.mxu0 0.0
    %704 = vmatpush1.msra.mxu0 0.0
    %705 = vmatprep.subr.mxu0 0.0
    %706 = vmatpush1.msra.mxu0 0.0
    %707 = vmatprep.subr.mxu0 0.0
    %708 = vmatpush1.msra.mxu0 0.0
    %709 = vmatprep.subr.mxu0 0.0
    %710 = vmatpush1.msra.mxu0 0.0
    %711 = vmatprep.subr.mxu0 0.0
    %712 = vmatpush1.msra.mxu0 0.0
    %713 = vmatprep.subr.mxu0 0.0
    %714 = vmatpush1.msra.mxu0 0.0
    %715 = vmatprep.mubr.f32.mxu0 0.0
    %716 = vmatmul.mubr.f32.gmra.mrb[0].mxu0 %v649
    %v717 = vpop.f32.mrb[0].mxu0
    %v718 = vadd.f32 0.0, %v717
    %v719 = vpop.f32.mrb[0].mxu0
    %720 = vdwg.mxu0
    %v722 = vsel %vm625, %v647, 0
    %724 = vmatprep.subr.mxu0 0.0
    %725 = vmatpush1.msra.mxu0 %v467
    %726 = vmatprep.subr.mxu0 0.0
    %727 = vmatpush1.msra.mxu0 0.0
    %728 = vmatprep.subr.mxu0 0.0
    %729 = vmatpush1.msra.mxu0 0.0
    %730 = vmatprep.subr.mxu0 0.0
    %731 = vmatpush1.msra.mxu0 0.0
    %732 = vmatprep.subr.mxu0 0.0
    %733 = vmatpush1.msra.mxu0 0.0
    %734 = vmatprep.subr.mxu0 0.0
    %735 = vmatpush1.msra.mxu0 0.0
    %736 = vmatprep.subr.mxu0 0.0
    %737 = vmatpush1.msra.mxu0 0.0
    %738 = vmatprep.subr.mxu0 0.0
    %739 = vmatpush1.msra.mxu0 0.0
    %740 = vmatprep.subr.mxu0 0.0
    %741 = vmatpush1.msra.mxu0 0.0
    %742 = vmatprep.subr.mxu0 0.0
    %743 = vmatpush1.msra.mxu0 0.0
    %744 = vmatprep.subr.mxu0 0.0
    %745 = vmatpush1.msra.mxu0 0.0
    %746 = vmatprep.subr.mxu0 0.0
    %747 = vmatpush1.msra.mxu0 0.0
    %748 = vmatprep.subr.mxu0 0.0
    %749 = vmatpush1.msra.mxu0 0.0
    %750 = vmatprep.subr.mxu0 0.0
    %751 = vmatpush1.msra.mxu0 0.0
    %752 = vmatprep.subr.mxu0 0.0
    %753 = vmatpush1.msra.mxu0 0.0
    %754 = vmatprep.subr.mxu0 0.0
    %755 = vmatpush1.msra.mxu0 0.0
    %756 = vmatprep.subr.mxu0 0.0
    %757 = vmatpush1.msra.mxu0 0.0
    %758 = vmatprep.subr.mxu0 0.0
    %759 = vmatpush1.msra.mxu0 0.0
    %760 = vmatprep.subr.mxu0 0.0
    %761 = vmatpush1.msra.mxu0 0.0
    %762 = vmatprep.subr.mxu0 0.0
    %763 = vmatpush1.msra.mxu0 0.0
    %764 = vmatprep.subr.mxu0 0.0
    %765 = vmatpush1.msra.mxu0 0.0
    %766 = vmatprep.subr.mxu0 0.0
    %767 = vmatpush1.msra.mxu0 0.0
    %768 = vmatprep.subr.mxu0 0.0
    %769 = vmatpush1.msra.mxu0 0.0
    %770 = vmatprep.subr.mxu0 0.0
    %771 = vmatpush1.msra.mxu0 0.0
    %772 = vmatprep.subr.mxu0 0.0
    %773 = vmatpush1.msra.mxu0 0.0
    %774 = vmatprep.subr.mxu0 0.0
    %775 = vmatpush1.msra.mxu0 0.0
    %776 = vmatprep.subr.mxu0 0.0
    %777 = vmatpush1.msra.mxu0 0.0
    %778 = vmatprep.subr.mxu0 0.0
    %779 = vmatpush1.msra.mxu0 0.0
    %780 = vmatprep.subr.mxu0 0.0
    %781 = vmatpush1.msra.mxu0 0.0
    %782 = vmatprep.subr.mxu0 0.0
    %783 = vmatpush1.msra.mxu0 0.0
    %784 = vmatprep.subr.mxu0 0.0
    %785 = vmatpush1.msra.mxu0 0.0
    %786 = vmatprep.subr.mxu0 0.0
    %787 = vmatpush1.msra.mxu0 0.0
    %788 = vmatprep.mubr.f32.mxu0 0.0
    %789 = vmatmul.mubr.f32.gmra.mrb[0].mxu0 %v722
    %v790 = vpop.f32.mrb[0].mxu0
    %v791 = vadd.f32 0.0, %v790
    %v792 = vpop.f32.mrb[0].mxu0
    %793 = vdwg.mxu0
    %794 = vrot.lane.b32.xlu0 %v421, 96
    %v795 = vpop.permute.xlu0 %794
    %796 = vrot.lane.b32.xlu0 %v423, 96
    %v797 = vpop.permute.xlu0 %796
    %v798 = vsel %vm470, %v795, 0
    %v800 = vsel %vm470, %v797, 0
    %802 = vmatprep.subr.mxu0 0.0
    %803 = vmatpush1.xpose.msra.mxu0 %v800
    %804 = vmatprep.subr.mxu0 0.0
    %805 = vmatpush1.xpose.msra.mxu0 0.0
    %806 = vmatprep.subr.mxu0 0.0
    %807 = vmatpush1.xpose.msra.mxu0 0.0
    %808 = vmatprep.subr.mxu0 0.0
    %809 = vmatpush1.xpose.msra.mxu0 0.0
    %810 = vmatprep.subr.mxu0 0.0
    %811 = vmatpush1.xpose.msra.mxu0 0.0
    %812 = vmatprep.subr.mxu0 0.0
    %813 = vmatpush1.xpose.msra.mxu0 0.0
    %814 = vmatprep.subr.mxu0 0.0
    %815 = vmatpush1.xpose.msra.mxu0 0.0
    %816 = vmatprep.subr.mxu0 0.0
    %817 = vmatpush1.xpose.msra.mxu0 0.0
    %818 = vmatprep.subr.mxu0 0.0
    %819 = vmatpush1.xpose.msra.mxu0 0.0
    %820 = vmatprep.subr.mxu0 0.0
    %821 = vmatpush1.xpose.msra.mxu0 0.0
    %822 = vmatprep.subr.mxu0 0.0
    %823 = vmatpush1.xpose.msra.mxu0 0.0
    %824 = vmatprep.subr.mxu0 0.0
    %825 = vmatpush1.xpose.msra.mxu0 0.0
    %826 = vmatprep.subr.mxu0 0.0
    %827 = vmatpush1.xpose.msra.mxu0 0.0
    %828 = vmatprep.subr.mxu0 0.0
    %829 = vmatpush1.xpose.msra.mxu0 0.0
    %830 = vmatprep.subr.mxu0 0.0
    %831 = vmatpush1.xpose.msra.mxu0 0.0
    %832 = vmatprep.subr.mxu0 0.0
    %833 = vmatpush1.xpose.msra.mxu0 0.0
    %834 = vmatprep.subr.mxu0 0.0
    %835 = vmatpush1.xpose.msra.mxu0 0.0
    %836 = vmatprep.subr.mxu0 0.0
    %837 = vmatpush1.xpose.msra.mxu0 0.0
    %838 = vmatprep.subr.mxu0 0.0
    %839 = vmatpush1.xpose.msra.mxu0 0.0
    %840 = vmatprep.subr.mxu0 0.0
    %841 = vmatpush1.xpose.msra.mxu0 0.0
    %842 = vmatprep.subr.mxu0 0.0
    %843 = vmatpush1.xpose.msra.mxu0 0.0
    %844 = vmatprep.subr.mxu0 0.0
    %845 = vmatpush1.xpose.msra.mxu0 0.0
    %846 = vmatprep.subr.mxu0 0.0
    %847 = vmatpush1.xpose.msra.mxu0 0.0
    %848 = vmatprep.subr.mxu0 0.0
    %849 = vmatpush1.xpose.msra.mxu0 0.0
    %850 = vmatprep.subr.mxu0 0.0
    %851 = vmatpush1.xpose.msra.mxu0 0.0
    %852 = vmatprep.subr.mxu0 0.0
    %853 = vmatpush1.xpose.msra.mxu0 0.0
    %854 = vmatprep.subr.mxu0 0.0
    %855 = vmatpush1.xpose.msra.mxu0 0.0
    %856 = vmatprep.subr.mxu0 0.0
    %857 = vmatpush1.xpose.msra.mxu0 0.0
    %858 = vmatprep.subr.mxu0 0.0
    %859 = vmatpush1.xpose.msra.mxu0 0.0
    %860 = vmatprep.subr.mxu0 0.0
    %861 = vmatpush1.xpose.msra.mxu0 0.0
    %862 = vmatprep.subr.mxu0 0.0
    %863 = vmatpush1.xpose.msra.mxu0 0.0
    %864 = vmatprep.subr.mxu0 0.0
    %865 = vmatpush1.xpose.msra.mxu0 0.0
    %866 = vmatprep.mubr.f32.mxu0 0.0
    %867 = vmatmul.mubr.f32.gmra.mrb[0].mxu0 %v798
    %v868 = vpop.f32.mrb[0].mxu0
    %v869 = vadd.f32 0.0, %v868
    %v870 = vpop.f32.mrb[0].mxu0
    %871 = vdwg.mxu0
    %872 = vrot.lane.b32.xlu0 %v425, 96
    %v873 = vpop.permute.xlu0 %872
    %874 = vrot.lane.b32.xlu0 %v427, 96
    %v875 = vpop.permute.xlu0 %874
    %v876 = vsel %vm470, %v873, 0
    %v878 = vsel %vm470, %v875, 0
    %880 = vmatprep.subr.mxu0 0.0
    %881 = vmatpush1.xpose.msra.mxu0 %v878
    %882 = vmatprep.subr.mxu0 0.0
    %883 = vmatpush1.xpose.msra.mxu0 0.0
    %884 = vmatprep.subr.mxu0 0.0
    %885 = vmatpush1.xpose.msra.mxu0 0.0
    %886 = vmatprep.subr.mxu0 0.0
    %887 = vmatpush1.xpose.msra.mxu0 0.0
    %888 = vmatprep.subr.mxu0 0.0
    %889 = vmatpush1.xpose.msra.mxu0 0.0
    %890 = vmatprep.subr.mxu0 0.0
    %891 = vmatpush1.xpose.msra.mxu0 0.0
    %892 = vmatprep.subr.mxu0 0.0
    %893 = vmatpush1.xpose.msra.mxu0 0.0
    %894 = vmatprep.subr.mxu0 0.0
    %895 = vmatpush1.xpose.msra.mxu0 0.0
    %896 = vmatprep.subr.mxu0 0.0
    %897 = vmatpush1.xpose.msra.mxu0 0.0
    %898 = vmatprep.subr.mxu0 0.0
    %899 = vmatpush1.xpose.msra.mxu0 0.0
    %900 = vmatprep.subr.mxu0 0.0
    %901 = vmatpush1.xpose.msra.mxu0 0.0
    %902 = vmatprep.subr.mxu0 0.0
    %903 = vmatpush1.xpose.msra.mxu0 0.0
    %904 = vmatprep.subr.mxu0 0.0
    %905 = vmatpush1.xpose.msra.mxu0 0.0
    %906 = vmatprep.subr.mxu0 0.0
    %907 = vmatpush1.xpose.msra.mxu0 0.0
    %908 = vmatprep.subr.mxu0 0.0
    %909 = vmatpush1.xpose.msra.mxu0 0.0
    %910 = vmatprep.subr.mxu0 0.0
    %911 = vmatpush1.xpose.msra.mxu0 0.0
    %912 = vmatprep.subr.mxu0 0.0
    %913 = vmatpush1.xpose.msra.mxu0 0.0
    %914 = vmatprep.subr.mxu0 0.0
    %915 = vmatpush1.xpose.msra.mxu0 0.0
    %916 = vmatprep.subr.mxu0 0.0
    %917 = vmatpush1.xpose.msra.mxu0 0.0
    %918 = vmatprep.subr.mxu0 0.0
    %919 = vmatpush1.xpose.msra.mxu0 0.0
    %920 = vmatprep.subr.mxu0 0.0
    %921 = vmatpush1.xpose.msra.mxu0 0.0
    %922 = vmatprep.subr.mxu0 0.0
    %923 = vmatpush1.xpose.msra.mxu0 0.0
    %924 = vmatprep.subr.mxu0 0.0
    %925 = vmatpush1.xpose.msra.mxu0 0.0
    %926 = vmatprep.subr.mxu0 0.0
    %927 = vmatpush1.xpose.msra.mxu0 0.0
    %928 = vmatprep.subr.mxu0 0.0
    %929 = vmatpush1.xpose.msra.mxu0 0.0
    %930 = vmatprep.subr.mxu0 0.0
    %931 = vmatpush1.xpose.msra.mxu0 0.0
    %932 = vmatprep.subr.mxu0 0.0
    %933 = vmatpush1.xpose.msra.mxu0 0.0
    %934 = vmatprep.subr.mxu0 0.0
    %935 = vmatpush1.xpose.msra.mxu0 0.0
    %936 = vmatprep.subr.mxu0 0.0
    %937 = vmatpush1.xpose.msra.mxu0 0.0
    %938 = vmatprep.subr.mxu0 0.0
    %939 = vmatpush1.xpose.msra.mxu0 0.0
    %940 = vmatprep.subr.mxu0 0.0
    %941 = vmatpush1.xpose.msra.mxu0 0.0
    %942 = vmatprep.subr.mxu0 0.0
    %943 = vmatpush1.xpose.msra.mxu0 0.0
    %944 = vmatprep.mubr.f32.mxu0 0.0
    %945 = vmatmul.mubr.f32.gmra.mrb[0].mxu0 %v876
    %v946 = vpop.f32.mrb[0].mxu0
    %v947 = vadd.f32 0.0, %v946
    %v948 = vpop.f32.mrb[0].mxu0
    %949 = vdwg.mxu0
    %v950 = vmul.f32 %v869, 0.17677669
    %v951 = vmul.f32 %v947, 0.17677669
    %v952 = vsel %vm625, %v950, -inf
    %953 = vmax.xlane.f32.xlu0 %v952
    %v954 = vpop.xlane.xlu0 %953
    %v955 = vsel %vm625, %v951, -inf
    %956 = vmax.xlane.f32.xlu0 %v955
    %v957 = vpop.xlane.xlu0 %956
    %v958 = vsub.f32 %v950, %v954
    %v959 = vsub.f32 %v951, %v957
    %v960 = vmul.f32 %v958, 1.442695
    %v961 = vpow.pop %v960
    %v962 = vmul.f32 %v959, 1.442695
    %v963 = vpow.pop %v962
    %v964 = vsel %vm625, %v961, 0.0
    %965 = vadd.xlane.f32.xlu0 %v964
    %v966 = vpop.xlane.xlu0 %965
    %v967 = vsel %vm625, %v963, 0.0
    %968 = vadd.xlane.f32.xlu0 %v967
    %v969 = vpop.xlane.xlu0 %968
    %v970 = vrcp.pop %v966
    %v971 = vrcp.pop %v969
    %v972 = vmul.f32 %v961, %v970
    %v973 = vmul.f32 %v963, %v971
    %975 = vrot.lane.b32.xlu0 %v464, 96
    %v976 = vpop.permute.xlu0 %975
    %v979 = vsel %vm625, %v972, 0
    %981 = vmatprep.subr.mxu0 0.0
    %982 = vmatpush1.msra.mxu0 %v976
    %983 = vmatprep.subr.mxu0 0.0
    %984 = vmatpush1.msra.mxu0 0.0
    %985 = vmatprep.subr.mxu0 0.0
    %986 = vmatpush1.msra.mxu0 0.0
    %987 = vmatprep.subr.mxu0 0.0
    %988 = vmatpush1.msra.mxu0 0.0
    %989 = vmatprep.subr.mxu0 0.0
    %990 = vmatpush1.msra.mxu0 0.0
    %991 = vmatprep.subr.mxu0 0.0
    %992 = vmatpush1.msra.mxu0 0.0
    %993 = vmatprep.subr.mxu0 0.0
    %994 = vmatpush1.msra.mxu0 0.0
    %995 = vmatprep.subr.mxu0 0.0
    %996 = vmatpush1.msra.mxu0 0.0
    %997 = vmatprep.subr.mxu0 0.0
    %998 = vmatpush1.msra.mxu0 0.0
    %999 = vmatprep.subr.mxu0 0.0
    %1000 = vmatpush1.msra.mxu0 0.0
    %1001 = vmatprep.subr.mxu0 0.0
    %1002 = vmatpush1.msra.mxu0 0.0
    %1003 = vmatprep.subr.mxu0 0.0
    %1004 = vmatpush1.msra.mxu0 0.0
    %1005 = vmatprep.subr.mxu0 0.0
    %1006 = vmatpush1.msra.mxu0 0.0
    %1007 = vmatprep.subr.mxu0 0.0
    %1008 = vmatpush1.msra.mxu0 0.0
    %1009 = vmatprep.subr.mxu0 0.0
    %1010 = vmatpush1.msra.mxu0 0.0
    %1011 = vmatprep.subr.mxu0 0.0
    %1012 = vmatpush1.msra.mxu0 0.0
    %1013 = vmatprep.subr.mxu0 0.0
    %1014 = vmatpush1.msra.mxu0 0.0
    %1015 = vmatprep.subr.mxu0 0.0
    %1016 = vmatpush1.msra.mxu0 0.0
    %1017 = vmatprep.subr.mxu0 0.0
    %1018 = vmatpush1.msra.mxu0 0.0
    %1019 = vmatprep.subr.mxu0 0.0
    %1020 = vmatpush1.msra.mxu0 0.0
    %1021 = vmatprep.subr.mxu0 0.0
    %1022 = vmatpush1.msra.mxu0 0.0
    %1023 = vmatprep.subr.mxu0 0.0
    %1024 = vmatpush1.msra.mxu0 0.0
    %1025 = vmatprep.subr.mxu0 0.0
    %1026 = vmatpush1.msra.mxu0 0.0
    %1027 = vmatprep.subr.mxu0 0.0
    %1028 = vmatpush1.msra.mxu0 0.0
    %1029 = vmatprep.subr.mxu0 0.0
    %1030 = vmatpush1.msra.mxu0 0.0
    %1031 = vmatprep.subr.mxu0 0.0
    %1032 = vmatpush1.msra.mxu0 0.0
    %1033 = vmatprep.subr.mxu0 0.0
    %1034 = vmatpush1.msra.mxu0 0.0
    %1035 = vmatprep.subr.mxu0 0.0
    %1036 = vmatpush1.msra.mxu0 0.0
    %1037 = vmatprep.subr.mxu0 0.0
    %1038 = vmatpush1.msra.mxu0 0.0
    %1039 = vmatprep.subr.mxu0 0.0
    %1040 = vmatpush1.msra.mxu0 0.0
    %1041 = vmatprep.subr.mxu0 0.0
    %1042 = vmatpush1.msra.mxu0 0.0
    %1043 = vmatprep.subr.mxu0 0.0
    %1044 = vmatpush1.msra.mxu0 0.0
    %1045 = vmatprep.mubr.f32.mxu0 0.0
    %1046 = vmatmul.mubr.f32.gmra.mrb[0].mxu0 %v979
    %v1047 = vpop.f32.mrb[0].mxu0
    %v1048 = vadd.f32 0.0, %v1047
    %v1049 = vpop.f32.mrb[0].mxu0
    %1050 = vdwg.mxu0
    %1052 = vrot.lane.b32.xlu0 %v467, 96
    %v1053 = vpop.permute.xlu0 %1052
    %v1056 = vsel %vm625, %v973, 0
    %1058 = vmatprep.subr.mxu0 0.0
    %1059 = vmatpush1.msra.mxu0 %v1053
    %1060 = vmatprep.subr.mxu0 0.0
    %1061 = vmatpush1.msra.mxu0 0.0
    %1062 = vmatprep.subr.mxu0 0.0
    %1063 = vmatpush1.msra.mxu0 0.0
    %1064 = vmatprep.subr.mxu0 0.0
    %1065 = vmatpush1.msra.mxu0 0.0
    %1066 = vmatprep.subr.mxu0 0.0
    %1067 = vmatpush1.msra.mxu0 0.0
    %1068 = vmatprep.subr.mxu0 0.0
    %1069 = vmatpush1.msra.mxu0 0.0
    %1070 = vmatprep.subr.mxu0 0.0
    %1071 = vmatpush1.msra.mxu0 0.0
    %1072 = vmatprep.subr.mxu0 0.0
    %1073 = vmatpush1.msra.mxu0 0.0
    %1074 = vmatprep.subr.mxu0 0.0
    %1075 = vmatpush1.msra.mxu0 0.0
    %1076 = vmatprep.subr.mxu0 0.0
    %1077 = vmatpush1.msra.mxu0 0.0
    %1078 = vmatprep.subr.mxu0 0.0
    %1079 = vmatpush1.msra.mxu0 0.0
    %1080 = vmatprep.subr.mxu0 0.0
    %1081 = vmatpush1.msra.mxu0 0.0
    %1082 = vmatprep.subr.mxu0 0.0
    %1083 = vmatpush1.msra.mxu0 0.0
    %1084 = vmatprep.subr.mxu0 0.0
    %1085 = vmatpush1.msra.mxu0 0.0
    %1086 = vmatprep.subr.mxu0 0.0
    %1087 = vmatpush1.msra.mxu0 0.0
    %1088 = vmatprep.subr.mxu0 0.0
    %1089 = vmatpush1.msra.mxu0 0.0
    %1090 = vmatprep.subr.mxu0 0.0
    %1091 = vmatpush1.msra.mxu0 0.0
    %1092 = vmatprep.subr.mxu0 0.0
    %1093 = vmatpush1.msra.mxu0 0.0
    %1094 = vmatprep.subr.mxu0 0.0
    %1095 = vmatpush1.msra.mxu0 0.0
    %1096 = vmatprep.subr.mxu0 0.0
    %1097 = vmatpush1.msra.mxu0 0.0
    %1098 = vmatprep.subr.mxu0 0.0
    %1099 = vmatpush1.msra.mxu0 0.0
    %1100 = vmatprep.subr.mxu0 0.0
    %1101 = vmatpush1.msra.mxu0 0.0
    %1102 = vmatprep.subr.mxu0 0.0
    %1103 = vmatpush1.msra.mxu0 0.0
    %1104 = vmatprep.subr.mxu0 0.0
    %1105 = vmatpush1.msra.mxu0 0.0
    %1106 = vmatprep.subr.mxu0 0.0
    %1107 = vmatpush1.msra.mxu0 0.0
    %1108 = vmatprep.subr.mxu0 0.0
    %1109 = vmatpush1.msra.mxu0 0.0
    %1110 = vmatprep.subr.mxu0 0.0
    %1111 = vmatpush1.msra.mxu0 0.0
    %1112 = vmatprep.subr.mxu0 0.0
    %1113 = vmatpush1.msra.mxu0 0.0
    %1114 = vmatprep.subr.mxu0 0.0
    %1115 = vmatpush1.msra.mxu0 0.0
    %1116 = vmatprep.subr.mxu0 0.0
    %1117 = vmatpush1.msra.mxu0 0.0
    %1118 = vmatprep.subr.mxu0 0.0
    %1119 = vmatpush1.msra.mxu0 0.0
    %1120 = vmatprep.subr.mxu0 0.0
    %1121 = vmatpush1.msra.mxu0 0.0
    %1122 = vmatprep.mubr.f32.mxu0 0.0
    %1123 = vmatmul.mubr.f32.gmra.mrb[0].mxu0 %v1056
    %v1124 = vpop.f32.mrb[0].mxu0
    %v1125 = vadd.f32 0.0, %v1124
    %v1126 = vpop.f32.mrb[0].mxu0
    %1127 = vdwg.mxu0
    %1128 = vrot.lane.b32.xlu0 %v421, 64
    %v1129 = vpop.permute.xlu0 %1128
    %1130 = vrot.lane.b32.xlu0 %v423, 64
    %v1131 = vpop.permute.xlu0 %1130
    %v1132 = vsel %vm470, %v1129, 0
    %v1134 = vsel %vm470, %v1131, 0
    %1136 = vmatprep.subr.mxu0 0.0
    %1137 = vmatpush1.xpose.msra.mxu0 %v1134
    %1138 = vmatprep.subr.mxu0 0.0
    %1139 = vmatpush1.xpose.msra.mxu0 0.0
    %1140 = vmatprep.subr.mxu0 0.0
    %1141 = vmatpush1.xpose.msra.mxu0 0.0
    %1142 = vmatprep.subr.mxu0 0.0
    %1143 = vmatpush1.xpose.msra.mxu0 0.0
    %1144 = vmatprep.subr.mxu0 0.0
    %1145 = vmatpush1.xpose.msra.mxu0 0.0
    %1146 = vmatprep.subr.mxu0 0.0
    %1147 = vmatpush1.xpose.msra.mxu0 0.0
    %1148 = vmatprep.subr.mxu0 0.0
    %1149 = vmatpush1.xpose.msra.mxu0 0.0
    %1150 = vmatprep.subr.mxu0 0.0
    %1151 = vmatpush1.xpose.msra.mxu0 0.0
    %1152 = vmatprep.subr.mxu0 0.0
    %1153 = vmatpush1.xpose.msra.mxu0 0.0
    %1154 = vmatprep.subr.mxu0 0.0
    %1155 = vmatpush1.xpose.msra.mxu0 0.0
    %1156 = vmatprep.subr.mxu0 0.0
    %1157 = vmatpush1.xpose.msra.mxu0 0.0
    %1158 = vmatprep.subr.mxu0 0.0
    %1159 = vmatpush1.xpose.msra.mxu0 0.0
    %1160 = vmatprep.subr.mxu0 0.0
    %1161 = vmatpush1.xpose.msra.mxu0 0.0
    %1162 = vmatprep.subr.mxu0 0.0
    %1163 = vmatpush1.xpose.msra.mxu0 0.0
    %1164 = vmatprep.subr.mxu0 0.0
    %1165 = vmatpush1.xpose.msra.mxu0 0.0
    %1166 = vmatprep.subr.mxu0 0.0
    %1167 = vmatpush1.xpose.msra.mxu0 0.0
    %1168 = vmatprep.subr.mxu0 0.0
    %1169 = vmatpush1.xpose.msra.mxu0 0.0
    %1170 = vmatprep.subr.mxu0 0.0
    %1171 = vmatpush1.xpose.msra.mxu0 0.0
    %1172 = vmatprep.subr.mxu0 0.0
    %1173 = vmatpush1.xpose.msra.mxu0 0.0
    %1174 = vmatprep.subr.mxu0 0.0
    %1175 = vmatpush1.xpose.msra.mxu0 0.0
    %1176 = vmatprep.subr.mxu0 0.0
    %1177 = vmatpush1.xpose.msra.mxu0 0.0
    %1178 = vmatprep.subr.mxu0 0.0
    %1179 = vmatpush1.xpose.msra.mxu0 0.0
    %1180 = vmatprep.subr.mxu0 0.0
    %1181 = vmatpush1.xpose.msra.mxu0 0.0
    %1182 = vmatprep.subr.mxu0 0.0
    %1183 = vmatpush1.xpose.msra.mxu0 0.0
    %1184 = vmatprep.subr.mxu0 0.0
    %1185 = vmatpush1.xpose.msra.mxu0 0.0
    %1186 = vmatprep.subr.mxu0 0.0
    %1187 = vmatpush1.xpose.msra.mxu0 0.0
    %1188 = vmatprep.subr.mxu0 0.0
    %1189 = vmatpush1.xpose.msra.mxu0 0.0
    %1190 = vmatprep.subr.mxu0 0.0
    %1191 = vmatpush1.xpose.msra.mxu0 0.0
    %1192 = vmatprep.subr.mxu0 0.0
    %1193 = vmatpush1.xpose.msra.mxu0 0.0
    %1194 = vmatprep.subr.mxu0 0.0
    %1195 = vmatpush1.xpose.msra.mxu0 0.0
    %1196 = vmatprep.subr.mxu0 0.0
    %1197 = vmatpush1.xpose.msra.mxu0 0.0
    %1198 = vmatprep.subr.mxu0 0.0
    %1199 = vmatpush1.xpose.msra.mxu0 0.0
    %1200 = vmatprep.mubr.f32.mxu0 0.0
    %1201 = vmatmul.mubr.f32.gmra.mrb[0].mxu0 %v1132
    %v1202 = vpop.f32.mrb[0].mxu0
    %v1203 = vadd.f32 0.0, %v1202
    %v1204 = vpop.f32.mrb[0].mxu0
    %1205 = vdwg.mxu0
    %1206 = vrot.lane.b32.xlu0 %v425, 64
    %v1207 = vpop.permute.xlu0 %1206
    %1208 = vrot.lane.b32.xlu0 %v427, 64
    %v1209 = vpop.permute.xlu0 %1208
    %v1210 = vsel %vm470, %v1207, 0
    %v1212 = vsel %vm470, %v1209, 0
    %1214 = vmatprep.subr.mxu0 0.0
    %1215 = vmatpush1.xpose.msra.mxu0 %v1212
    %1216 = vmatprep.subr.mxu0 0.0
    %1217 = vmatpush1.xpose.msra.mxu0 0.0
    %1218 = vmatprep.subr.mxu0 0.0
    %1219 = vmatpush1.xpose.msra.mxu0 0.0
    %1220 = vmatprep.subr.mxu0 0.0
    %1221 = vmatpush1.xpose.msra.mxu0 0.0
    %1222 = vmatprep.subr.mxu0 0.0
    %1223 = vmatpush1.xpose.msra.mxu0 0.0
    %1224 = vmatprep.subr.mxu0 0.0
    %1225 = vmatpush1.xpose.msra.mxu0 0.0
    %1226 = vmatprep.subr.mxu0 0.0
    %1227 = vmatpush1.xpose.msra.mxu0 0.0
    %1228 = vmatprep.subr.mxu0 0.0
    %1229 = vmatpush1.xpose.msra.mxu0 0.0
    %1230 = vmatprep.subr.mxu0 0.0
    %1231 = vmatpush1.xpose.msra.mxu0 0.0
    %1232 = vmatprep.subr.mxu0 0.0
    %1233 = vmatpush1.xpose.msra.mxu0 0.0
    %1234 = vmatprep.subr.mxu0 0.0
    %1235 = vmatpush1.xpose.msra.mxu0 0.0
    %1236 = vmatprep.subr.mxu0 0.0
    %1237 = vmatpush1.xpose.msra.mxu0 0.0
    %1238 = vmatprep.subr.mxu0 0.0
    %1239 = vmatpush1.xpose.msra.mxu0 0.0
    %1240 = vmatprep.subr.mxu0 0.0
    %1241 = vmatpush1.xpose.msra.mxu0 0.0
    %1242 = vmatprep.subr.mxu0 0.0
    %1243 = vmatpush1.xpose.msra.mxu0 0.0
    %1244 = vmatprep.subr.mxu0 0.0
    %1245 = vmatpush1.xpose.msra.mxu0 0.0
    %1246 = vmatprep.subr.mxu0 0.0
    %1247 = vmatpush1.xpose.msra.mxu0 0.0
    %1248 = vmatprep.subr.mxu0 0.0
    %1249 = vmatpush1.xpose.msra.mxu0 0.0
    %1250 = vmatprep.subr.mxu0 0.0
    %1251 = vmatpush1.xpose.msra.mxu0 0.0
    %1252 = vmatprep.subr.mxu0 0.0
    %1253 = vmatpush1.xpose.msra.mxu0 0.0
    %1254 = vmatprep.subr.mxu0 0.0
    %1255 = vmatpush1.xpose.msra.mxu0 0.0
    %1256 = vmatprep.subr.mxu0 0.0
    %1257 = vmatpush1.xpose.msra.mxu0 0.0
    %1258 = vmatprep.subr.mxu0 0.0
    %1259 = vmatpush1.xpose.msra.mxu0 0.0
    %1260 = vmatprep.subr.mxu0 0.0
    %1261 = vmatpush1.xpose.msra.mxu0 0.0
    %1262 = vmatprep.subr.mxu0 0.0
    %1263 = vmatpush1.xpose.msra.mxu0 0.0
    %1264 = vmatprep.subr.mxu0 0.0
    %1265 = vmatpush1.xpose.msra.mxu0 0.0
    %1266 = vmatprep.subr.mxu0 0.0
    %1267 = vmatpush1.xpose.msra.mxu0 0.0
    %1268 = vmatprep.subr.mxu0 0.0
    %1269 = vmatpush1.xpose.msra.mxu0 0.0
    %1270 = vmatprep.subr.mxu0 0.0
    %1271 = vmatpush1.xpose.msra.mxu0 0.0
    %1272 = vmatprep.subr.mxu0 0.0
    %1273 = vmatpush1.xpose.msra.mxu0 0.0
    %1274 = vmatprep.subr.mxu0 0.0
    %1275 = vmatpush1.xpose.msra.mxu0 0.0
    %1276 = vmatprep.subr.mxu0 0.0
    %1277 = vmatpush1.xpose.msra.mxu0 0.0
    %1278 = vmatprep.mubr.f32.mxu0 0.0
    %1279 = vmatmul.mubr.f32.gmra.mrb[0].mxu0 %v1210
    %v1280 = vpop.f32.mrb[0].mxu0
    %v1281 = vadd.f32 0.0, %v1280
    %v1282 = vpop.f32.mrb[0].mxu0
    %1283 = vdwg.mxu0
    %v1284 = vmul.f32 %v1203, 0.17677669
    %v1285 = vmul.f32 %v1281, 0.17677669
    %v1286 = vsel %vm625, %v1284, -inf
    %1287 = vmax.xlane.f32.xlu0 %v1286
    %v1288 = vpop.xlane.xlu0 %1287
    %v1289 = vsel %vm625, %v1285, -inf
    %1290 = vmax.xlane.f32.xlu0 %v1289
    %v1291 = vpop.xlane.xlu0 %1290
    %v1292 = vsub.f32 %v1284, %v1288
    %v1293 = vsub.f32 %v1285, %v1291
    %v1294 = vmul.f32 %v1292, 1.442695
    %v1295 = vpow.pop %v1294
    %v1296 = vmul.f32 %v1293, 1.442695
    %v1297 = vpow.pop %v1296
    %v1298 = vsel %vm625, %v1295, 0.0
    %1299 = vadd.xlane.f32.xlu0 %v1298
    %v1300 = vpop.xlane.xlu0 %1299
    %v1301 = vsel %vm625, %v1297, 0.0
    %1302 = vadd.xlane.f32.xlu0 %v1301
    %v1303 = vpop.xlane.xlu0 %1302
    %v1304 = vrcp.pop %v1300
    %v1305 = vrcp.pop %v1303
    %v1306 = vmul.f32 %v1295, %v1304
    %v1307 = vmul.f32 %v1297, %v1305
    %1308 = vrot.lane.b32.xlu0 %v464, 64
    %v1309 = vpop.permute.xlu0 %1308
    %v1312 = vsel %vm625, %v1306, 0
    %1314 = vmatprep.subr.mxu0 0.0
    %1315 = vmatpush1.msra.mxu0 %v1309
    %1316 = vmatprep.subr.mxu0 0.0
    %1317 = vmatpush1.msra.mxu0 0.0
    %1318 = vmatprep.subr.mxu0 0.0
    %1319 = vmatpush1.msra.mxu0 0.0
    %1320 = vmatprep.subr.mxu0 0.0
    %1321 = vmatpush1.msra.mxu0 0.0
    %1322 = vmatprep.subr.mxu0 0.0
    %1323 = vmatpush1.msra.mxu0 0.0
    %1324 = vmatprep.subr.mxu0 0.0
    %1325 = vmatpush1.msra.mxu0 0.0
    %1326 = vmatprep.subr.mxu0 0.0
    %1327 = vmatpush1.msra.mxu0 0.0
    %1328 = vmatprep.subr.mxu0 0.0
    %1329 = vmatpush1.msra.mxu0 0.0
    %1330 = vmatprep.subr.mxu0 0.0
    %1331 = vmatpush1.msra.mxu0 0.0
    %1332 = vmatprep.subr.mxu0 0.0
    %1333 = vmatpush1.msra.mxu0 0.0
    %1334 = vmatprep.subr.mxu0 0.0
    %1335 = vmatpush1.msra.mxu0 0.0
    %1336 = vmatprep.subr.mxu0 0.0
    %1337 = vmatpush1.msra.mxu0 0.0
    %1338 = vmatprep.subr.mxu0 0.0
    %1339 = vmatpush1.msra.mxu0 0.0
    %1340 = vmatprep.subr.mxu0 0.0
    %1341 = vmatpush1.msra.mxu0 0.0
    %1342 = vmatprep.subr.mxu0 0.0
    %1343 = vmatpush1.msra.mxu0 0.0
    %1344 = vmatprep.subr.mxu0 0.0
    %1345 = vmatpush1.msra.mxu0 0.0
    %1346 = vmatprep.subr.mxu0 0.0
    %1347 = vmatpush1.msra.mxu0 0.0
    %1348 = vmatprep.subr.mxu0 0.0
    %1349 = vmatpush1.msra.mxu0 0.0
    %1350 = vmatprep.subr.mxu0 0.0
    %1351 = vmatpush1.msra.mxu0 0.0
    %1352 = vmatprep.subr.mxu0 0.0
    %1353 = vmatpush1.msra.mxu0 0.0
    %1354 = vmatprep.subr.mxu0 0.0
    %1355 = vmatpush1.msra.mxu0 0.0
    %1356 = vmatprep.subr.mxu0 0.0
    %1357 = vmatpush1.msra.mxu0 0.0
    %1358 = vmatprep.subr.mxu0 0.0
    %1359 = vmatpush1.msra.mxu0 0.0
    %1360 = vmatprep.subr.mxu0 0.0
    %1361 = vmatpush1.msra.mxu0 0.0
    %1362 = vmatprep.subr.mxu0 0.0
    %1363 = vmatpush1.msra.mxu0 0.0
    %1364 = vmatprep.subr.mxu0 0.0
    %1365 = vmatpush1.msra.mxu0 0.0
    %1366 = vmatprep.subr.mxu0 0.0
    %1367 = vmatpush1.msra.mxu0 0.0
    %1368 = vmatprep.subr.mxu0 0.0
    %1369 = vmatpush1.msra.mxu0 0.0
    %1370 = vmatprep.subr.mxu0 0.0
    %1371 = vmatpush1.msra.mxu0 0.0
    %1372 = vmatprep.subr.mxu0 0.0
    %1373 = vmatpush1.msra.mxu0 0.0
    %1374 = vmatprep.subr.mxu0 0.0
    %1375 = vmatpush1.msra.mxu0 0.0
    %1376 = vmatprep.subr.mxu0 0.0
    %1377 = vmatpush1.msra.mxu0 0.0
    %1378 = vmatprep.mubr.f32.mxu0 0.0
    %1379 = vmatmul.mubr.f32.gmra.mrb[0].mxu0 %v1312
    %v1380 = vpop.f32.mrb[0].mxu0
    %v1381 = vadd.f32 0.0, %v1380
    %v1382 = vpop.f32.mrb[0].mxu0
    %1383 = vdwg.mxu0
    %1384 = vrot.lane.b32.xlu0 %v467, 64
    %v1385 = vpop.permute.xlu0 %1384
    %v1388 = vsel %vm625, %v1307, 0
    %1390 = vmatprep.subr.mxu0 0.0
    %1391 = vmatpush1.msra.mxu0 %v1385
    %1392 = vmatprep.subr.mxu0 0.0
    %1393 = vmatpush1.msra.mxu0 0.0
    %1394 = vmatprep.subr.mxu0 0.0
    %1395 = vmatpush1.msra.mxu0 0.0
    %1396 = vmatprep.subr.mxu0 0.0
    %1397 = vmatpush1.msra.mxu0 0.0
    %1398 = vmatprep.subr.mxu0 0.0
    %1399 = vmatpush1.msra.mxu0 0.0
    %1400 = vmatprep.subr.mxu0 0.0
    %1401 = vmatpush1.msra.mxu0 0.0
    %1402 = vmatprep.subr.mxu0 0.0
    %1403 = vmatpush1.msra.mxu0 0.0
    %1404 = vmatprep.subr.mxu0 0.0
    %1405 = vmatpush1.msra.mxu0 0.0
    %1406 = vmatprep.subr.mxu0 0.0
    %1407 = vmatpush1.msra.mxu0 0.0
    %1408 = vmatprep.subr.mxu0 0.0
    %1409 = vmatpush1.msra.mxu0 0.0
    %1410 = vmatprep.subr.mxu0 0.0
    %1411 = vmatpush1.msra.mxu0 0.0
    %1412 = vmatprep.subr.mxu0 0.0
    %1413 = vmatpush1.msra.mxu0 0.0
    %1414 = vmatprep.subr.mxu0 0.0
    %1415 = vmatpush1.msra.mxu0 0.0
    %1416 = vmatprep.subr.mxu0 0.0
    %1417 = vmatpush1.msra.mxu0 0.0
    %1418 = vmatprep.subr.mxu0 0.0
    %1419 = vmatpush1.msra.mxu0 0.0
    %1420 = vmatprep.subr.mxu0 0.0
    %1421 = vmatpush1.msra.mxu0 0.0
    %1422 = vmatprep.subr.mxu0 0.0
    %1423 = vmatpush1.msra.mxu0 0.0
    %1424 = vmatprep.subr.mxu0 0.0
    %1425 = vmatpush1.msra.mxu0 0.0
    %1426 = vmatprep.subr.mxu0 0.0
    %1427 = vmatpush1.msra.mxu0 0.0
    %1428 = vmatprep.subr.mxu0 0.0
    %1429 = vmatpush1.msra.mxu0 0.0
    %1430 = vmatprep.subr.mxu0 0.0
    %1431 = vmatpush1.msra.mxu0 0.0
    %1432 = vmatprep.subr.mxu0 0.0
    %1433 = vmatpush1.msra.mxu0 0.0
    %1434 = vmatprep.subr.mxu0 0.0
    %1435 = vmatpush1.msra.mxu0 0.0
    %1436 = vmatprep.subr.mxu0 0.0
    %1437 = vmatpush1.msra.mxu0 0.0
    %1438 = vmatprep.subr.mxu0 0.0
    %1439 = vmatpush1.msra.mxu0 0.0
    %1440 = vmatprep.subr.mxu0 0.0
    %1441 = vmatpush1.msra.mxu0 0.0
    %1442 = vmatprep.subr.mxu0 0.0
    %1443 = vmatpush1.msra.mxu0 0.0
    %1444 = vmatprep.subr.mxu0 0.0
    %1445 = vmatpush1.msra.mxu0 0.0
    %1446 = vmatprep.subr.mxu0 0.0
    %1447 = vmatpush1.msra.mxu0 0.0
    %1448 = vmatprep.subr.mxu0 0.0
    %1449 = vmatpush1.msra.mxu0 0.0
    %1450 = vmatprep.subr.mxu0 0.0
    %1451 = vmatpush1.msra.mxu0 0.0
    %1452 = vmatprep.subr.mxu0 0.0
    %1453 = vmatpush1.msra.mxu0 0.0
    %1454 = vmatprep.mubr.f32.mxu0 0.0
    %1455 = vmatmul.mubr.f32.gmra.mrb[0].mxu0 %v1388
    %v1456 = vpop.f32.mrb[0].mxu0
    %v1457 = vadd.f32 0.0, %v1456
    %v1458 = vpop.f32.mrb[0].mxu0
    %1459 = vdwg.mxu0
    %1460 = vrot.lane.b32.xlu0 %v421, 32
    %v1461 = vpop.permute.xlu0 %1460
    %1462 = vrot.lane.b32.xlu0 %v423, 32
    %v1463 = vpop.permute.xlu0 %1462
    %v1464 = vsel %vm470, %v1461, 0
    %v1466 = vsel %vm470, %v1463, 0
    %1468 = vmatprep.subr.mxu0 0.0
    %1469 = vmatpush1.xpose.msra.mxu0 %v1466
    %1470 = vmatprep.subr.mxu0 0.0
    %1471 = vmatpush1.xpose.msra.mxu0 0.0
    %1472 = vmatprep.subr.mxu0 0.0
    %1473 = vmatpush1.xpose.msra.mxu0 0.0
    %1474 = vmatprep.subr.mxu0 0.0
    %1475 = vmatpush1.xpose.msra.mxu0 0.0
    %1476 = vmatprep.subr.mxu0 0.0
    %1477 = vmatpush1.xpose.msra.mxu0 0.0
    %1478 = vmatprep.subr.mxu0 0.0
    %1479 = vmatpush1.xpose.msra.mxu0 0.0
    %1480 = vmatprep.subr.mxu0 0.0
    %1481 = vmatpush1.xpose.msra.mxu0 0.0
    %1482 = vmatprep.subr.mxu0 0.0
    %1483 = vmatpush1.xpose.msra.mxu0 0.0
    %1484 = vmatprep.subr.mxu0 0.0
    %1485 = vmatpush1.xpose.msra.mxu0 0.0
    %1486 = vmatprep.subr.mxu0 0.0
    %1487 = vmatpush1.xpose.msra.mxu0 0.0
    %1488 = vmatprep.subr.mxu0 0.0
    %1489 = vmatpush1.xpose.msra.mxu0 0.0
    %1490 = vmatprep.subr.mxu0 0.0
    %1491 = vmatpush1.xpose.msra.mxu0 0.0
    %1492 = vmatprep.subr.mxu0 0.0
    %1493 = vmatpush1.xpose.msra.mxu0 0.0
    %1494 = vmatprep.subr.mxu0 0.0
    %1495 = vmatpush1.xpose.msra.mxu0 0.0
    %1496 = vmatprep.subr.mxu0 0.0
    %1497 = vmatpush1.xpose.msra.mxu0 0.0
    %1498 = vmatprep.subr.mxu0 0.0
    %1499 = vmatpush1.xpose.msra.mxu0 0.0
    %1500 = vmatprep.subr.mxu0 0.0
    %1501 = vmatpush1.xpose.msra.mxu0 0.0
    %1502 = vmatprep.subr.mxu0 0.0
    %1503 = vmatpush1.xpose.msra.mxu0 0.0
    %1504 = vmatprep.subr.mxu0 0.0
    %1505 = vmatpush1.xpose.msra.mxu0 0.0
    %1506 = vmatprep.subr.mxu0 0.0
    %1507 = vmatpush1.xpose.msra.mxu0 0.0
    %1508 = vmatprep.subr.mxu0 0.0
    %1509 = vmatpush1.xpose.msra.mxu0 0.0
    %1510 = vmatprep.subr.mxu0 0.0
    %1511 = vmatpush1.xpose.msra.mxu0 0.0
    %1512 = vmatprep.subr.mxu0 0.0
    %1513 = vmatpush1.xpose.msra.mxu0 0.0
    %1514 = vmatprep.subr.mxu0 0.0
    %1515 = vmatpush1.xpose.msra.mxu0 0.0
    %1516 = vmatprep.subr.mxu0 0.0
    %1517 = vmatpush1.xpose.msra.mxu0 0.0
    %1518 = vmatprep.subr.mxu0 0.0
    %1519 = vmatpush1.xpose.msra.mxu0 0.0
    %1520 = vmatprep.subr.mxu0 0.0
    %1521 = vmatpush1.xpose.msra.mxu0 0.0
    %1522 = vmatprep.subr.mxu0 0.0
    %1523 = vmatpush1.xpose.msra.mxu0 0.0
    %1524 = vmatprep.subr.mxu0 0.0
    %1525 = vmatpush1.xpose.msra.mxu0 0.0
    %1526 = vmatprep.subr.mxu0 0.0
    %1527 = vmatpush1.xpose.msra.mxu0 0.0
    %1528 = vmatprep.subr.mxu0 0.0
    %1529 = vmatpush1.xpose.msra.mxu0 0.0
    %1530 = vmatprep.subr.mxu0 0.0
    %1531 = vmatpush1.xpose.msra.mxu0 0.0
    %1532 = vmatprep.mubr.f32.mxu0 0.0
    %1533 = vmatmul.mubr.f32.gmra.mrb[0].mxu0 %v1464
    %v1534 = vpop.f32.mrb[0].mxu0
    %v1535 = vadd.f32 0.0, %v1534
    %v1536 = vpop.f32.mrb[0].mxu0
    %1537 = vdwg.mxu0
    %1538 = vrot.lane.b32.xlu0 %v425, 32
    %v1539 = vpop.permute.xlu0 %1538
    %1540 = vrot.lane.b32.xlu0 %v427, 32
    %v1541 = vpop.permute.xlu0 %1540
    %v1542 = vsel %vm470, %v1539, 0
    %v1544 = vsel %vm470, %v1541, 0
    %1546 = vmatprep.subr.mxu0 0.0
    %1547 = vmatpush1.xpose.msra.mxu0 %v1544
    %1548 = vmatprep.subr.mxu0 0.0
    %1549 = vmatpush1.xpose.msra.mxu0 0.0
    %1550 = vmatprep.subr.mxu0 0.0
    %1551 = vmatpush1.xpose.msra.mxu0 0.0
    %1552 = vmatprep.subr.mxu0 0.0
    %1553 = vmatpush1.xpose.msra.mxu0 0.0
    %1554 = vmatprep.subr.mxu0 0.0
    %1555 = vmatpush1.xpose.msra.mxu0 0.0
    %1556 = vmatprep.subr.mxu0 0.0
    %1557 = vmatpush1.xpose.msra.mxu0 0.0
    %1558 = vmatprep.subr.mxu0 0.0
    %1559 = vmatpush1.xpose.msra.mxu0 0.0
    %1560 = vmatprep.subr.mxu0 0.0
    %1561 = vmatpush1.xpose.msra.mxu0 0.0
    %1562 = vmatprep.subr.mxu0 0.0
    %1563 = vmatpush1.xpose.msra.mxu0 0.0
    %1564 = vmatprep.subr.mxu0 0.0
    %1565 = vmatpush1.xpose.msra.mxu0 0.0
    %1566 = vmatprep.subr.mxu0 0.0
    %1567 = vmatpush1.xpose.msra.mxu0 0.0
    %1568 = vmatprep.subr.mxu0 0.0
    %1569 = vmatpush1.xpose.msra.mxu0 0.0
    %1570 = vmatprep.subr.mxu0 0.0
    %1571 = vmatpush1.xpose.msra.mxu0 0.0
    %1572 = vmatprep.subr.mxu0 0.0
    %1573 = vmatpush1.xpose.msra.mxu0 0.0
    %1574 = vmatprep.subr.mxu0 0.0
    %1575 = vmatpush1.xpose.msra.mxu0 0.0
    %1576 = vmatprep.subr.mxu0 0.0
    %1577 = vmatpush1.xpose.msra.mxu0 0.0
    %1578 = vmatprep.subr.mxu0 0.0
    %1579 = vmatpush1.xpose.msra.mxu0 0.0
    %1580 = vmatprep.subr.mxu0 0.0
    %1581 = vmatpush1.xpose.msra.mxu0 0.0
    %1582 = vmatprep.subr.mxu0 0.0
    %1583 = vmatpush1.xpose.msra.mxu0 0.0
    %1584 = vmatprep.subr.mxu0 0.0
    %1585 = vmatpush1.xpose.msra.mxu0 0.0
    %1586 = vmatprep.subr.mxu0 0.0
    %1587 = vmatpush1.xpose.msra.mxu0 0.0
    %1588 = vmatprep.subr.mxu0 0.0
    %1589 = vmatpush1.xpose.msra.mxu0 0.0
    %1590 = vmatprep.subr.mxu0 0.0
    %1591 = vmatpush1.xpose.msra.mxu0 0.0
    %1592 = vmatprep.subr.mxu0 0.0
    %1593 = vmatpush1.xpose.msra.mxu0 0.0
    %1594 = vmatprep.subr.mxu0 0.0
    %1595 = vmatpush1.xpose.msra.mxu0 0.0
    %1596 = vmatprep.subr.mxu0 0.0
    %1597 = vmatpush1.xpose.msra.mxu0 0.0
    %1598 = vmatprep.subr.mxu0 0.0
    %1599 = vmatpush1.xpose.msra.mxu0 0.0
    %1600 = vmatprep.subr.mxu0 0.0
    %1601 = vmatpush1.xpose.msra.mxu0 0.0
    %1602 = vmatprep.subr.mxu0 0.0
    %1603 = vmatpush1.xpose.msra.mxu0 0.0
    %1604 = vmatprep.subr.mxu0 0.0
    %1605 = vmatpush1.xpose.msra.mxu0 0.0
    %1606 = vmatprep.subr.mxu0 0.0
    %1607 = vmatpush1.xpose.msra.mxu0 0.0
    %1608 = vmatprep.subr.mxu0 0.0
    %1609 = vmatpush1.xpose.msra.mxu0 0.0
    %1610 = vmatprep.mubr.f32.mxu0 0.0
    %1611 = vmatmul.mubr.f32.gmra.mrb[0].mxu0 %v1542
    %v1612 = vpop.f32.mrb[0].mxu0
    %v1613 = vadd.f32 0.0, %v1612
    %v1614 = vpop.f32.mrb[0].mxu0
    %1615 = vdwg.mxu0
    %v1616 = vmul.f32 %v1535, 0.17677669
    %v1617 = vmul.f32 %v1613, 0.17677669
    %v1618 = vsel %vm625, %v1616, -inf
    %1619 = vmax.xlane.f32.xlu0 %v1618
    %v1620 = vpop.xlane.xlu0 %1619
    %v1621 = vsel %vm625, %v1617, -inf
    %1622 = vmax.xlane.f32.xlu0 %v1621
    %v1623 = vpop.xlane.xlu0 %1622
    %v1624 = vsub.f32 %v1616, %v1620
    %v1625 = vsub.f32 %v1617, %v1623
    %v1626 = vmul.f32 %v1624, 1.442695
    %v1627 = vpow.pop %v1626
    %v1628 = vmul.f32 %v1625, 1.442695
    %v1629 = vpow.pop %v1628
    %v1630 = vsel %vm625, %v1627, 0.0
    %1631 = vadd.xlane.f32.xlu0 %v1630
    %v1632 = vpop.xlane.xlu0 %1631
    %v1633 = vsel %vm625, %v1629, 0.0
    %1634 = vadd.xlane.f32.xlu0 %v1633
    %v1635 = vpop.xlane.xlu0 %1634
    %v1636 = vrcp.pop %v1632
    %v1637 = vrcp.pop %v1635
    %v1638 = vmul.f32 %v1627, %v1636
    %v1639 = vmul.f32 %v1629, %v1637
    %1640 = vrot.lane.b32.xlu0 %v464, 32
    %v1641 = vpop.permute.xlu0 %1640
    %v1644 = vsel %vm625, %v1638, 0
    %1646 = vmatprep.subr.mxu0 0.0
    %1647 = vmatpush1.msra.mxu0 %v1641
    %1648 = vmatprep.subr.mxu0 0.0
    %1649 = vmatpush1.msra.mxu0 0.0
    %1650 = vmatprep.subr.mxu0 0.0
    %1651 = vmatpush1.msra.mxu0 0.0
    %1652 = vmatprep.subr.mxu0 0.0
    %1653 = vmatpush1.msra.mxu0 0.0
    %1654 = vmatprep.subr.mxu0 0.0
    %1655 = vmatpush1.msra.mxu0 0.0
    %1656 = vmatprep.subr.mxu0 0.0
    %1657 = vmatpush1.msra.mxu0 0.0
    %1658 = vmatprep.subr.mxu0 0.0
    %1659 = vmatpush1.msra.mxu0 0.0
    %1660 = vmatprep.subr.mxu0 0.0
    %1661 = vmatpush1.msra.mxu0 0.0
    %1662 = vmatprep.subr.mxu0 0.0
    %1663 = vmatpush1.msra.mxu0 0.0
    %1664 = vmatprep.subr.mxu0 0.0
    %1665 = vmatpush1.msra.mxu0 0.0
    %1666 = vmatprep.subr.mxu0 0.0
    %1667 = vmatpush1.msra.mxu0 0.0
    %1668 = vmatprep.subr.mxu0 0.0
    %1669 = vmatpush1.msra.mxu0 0.0
    %1670 = vmatprep.subr.mxu0 0.0
    %1671 = vmatpush1.msra.mxu0 0.0
    %1672 = vmatprep.subr.mxu0 0.0
    %1673 = vmatpush1.msra.mxu0 0.0
    %1674 = vmatprep.subr.mxu0 0.0
    %1675 = vmatpush1.msra.mxu0 0.0
    %1676 = vmatprep.subr.mxu0 0.0
    %1677 = vmatpush1.msra.mxu0 0.0
    %1678 = vmatprep.subr.mxu0 0.0
    %1679 = vmatpush1.msra.mxu0 0.0
    %1680 = vmatprep.subr.mxu0 0.0
    %1681 = vmatpush1.msra.mxu0 0.0
    %1682 = vmatprep.subr.mxu0 0.0
    %1683 = vmatpush1.msra.mxu0 0.0
    %1684 = vmatprep.subr.mxu0 0.0
    %1685 = vmatpush1.msra.mxu0 0.0
    %1686 = vmatprep.subr.mxu0 0.0
    %1687 = vmatpush1.msra.mxu0 0.0
    %1688 = vmatprep.subr.mxu0 0.0
    %1689 = vmatpush1.msra.mxu0 0.0
    %1690 = vmatprep.subr.mxu0 0.0
    %1691 = vmatpush1.msra.mxu0 0.0
    %1692 = vmatprep.subr.mxu0 0.0
    %1693 = vmatpush1.msra.mxu0 0.0
    %1694 = vmatprep.subr.mxu0 0.0
    %1695 = vmatpush1.msra.mxu0 0.0
    %1696 = vmatprep.subr.mxu0 0.0
    %1697 = vmatpush1.msra.mxu0 0.0
    %1698 = vmatprep.subr.mxu0 0.0
    %1699 = vmatpush1.msra.mxu0 0.0
    %1700 = vmatprep.subr.mxu0 0.0
    %1701 = vmatpush1.msra.mxu0 0.0
    %1702 = vmatprep.subr.mxu0 0.0
    %1703 = vmatpush1.msra.mxu0 0.0
    %1704 = vmatprep.subr.mxu0 0.0
    %1705 = vmatpush1.msra.mxu0 0.0
    %1706 = vmatprep.subr.mxu0 0.0
    %1707 = vmatpush1.msra.mxu0 0.0
    %1708 = vmatprep.subr.mxu0 0.0
    %1709 = vmatpush1.msra.mxu0 0.0
    %1710 = vmatprep.mubr.f32.mxu0 0.0
    %1711 = vmatmul.mubr.f32.gmra.mrb[0].mxu0 %v1644
    %v1712 = vpop.f32.mrb[0].mxu0
    %v1713 = vadd.f32 0.0, %v1712
    %v1714 = vpop.f32.mrb[0].mxu0
    %1715 = vdwg.mxu0
    %1716 = vrot.lane.b32.xlu0 %v467, 32
    %v1717 = vpop.permute.xlu0 %1716
    %v1720 = vsel %vm625, %v1639, 0
    %1722 = vmatprep.subr.mxu0 0.0
    %1723 = vmatpush1.msra.mxu0 %v1717
    %1724 = vmatprep.subr.mxu0 0.0
    %1725 = vmatpush1.msra.mxu0 0.0
    %1726 = vmatprep.subr.mxu0 0.0
    %1727 = vmatpush1.msra.mxu0 0.0
    %1728 = vmatprep.subr.mxu0 0.0
    %1729 = vmatpush1.msra.mxu0 0.0
    %1730 = vmatprep.subr.mxu0 0.0
    %1731 = vmatpush1.msra.mxu0 0.0
    %1732 = vmatprep.subr.mxu0 0.0
    %1733 = vmatpush1.msra.mxu0 0.0
    %1734 = vmatprep.subr.mxu0 0.0
    %1735 = vmatpush1.msra.mxu0 0.0
    %1736 = vmatprep.subr.mxu0 0.0
    %1737 = vmatpush1.msra.mxu0 0.0
    %1738 = vmatprep.subr.mxu0 0.0
    %1739 = vmatpush1.msra.mxu0 0.0
    %1740 = vmatprep.subr.mxu0 0.0
    %1741 = vmatpush1.msra.mxu0 0.0
    %1742 = vmatprep.subr.mxu0 0.0
    %1743 = vmatpush1.msra.mxu0 0.0
    %1744 = vmatprep.subr.mxu0 0.0
    %1745 = vmatpush1.msra.mxu0 0.0
    %1746 = vmatprep.subr.mxu0 0.0
    %1747 = vmatpush1.msra.mxu0 0.0
    %1748 = vmatprep.subr.mxu0 0.0
    %1749 = vmatpush1.msra.mxu0 0.0
    %1750 = vmatprep.subr.mxu0 0.0
    %1751 = vmatpush1.msra.mxu0 0.0
    %1752 = vmatprep.subr.mxu0 0.0
    %1753 = vmatpush1.msra.mxu0 0.0
    %1754 = vmatprep.subr.mxu0 0.0
    %1755 = vmatpush1.msra.mxu0 0.0
    %1756 = vmatprep.subr.mxu0 0.0
    %1757 = vmatpush1.msra.mxu0 0.0
    %1758 = vmatprep.subr.mxu0 0.0
    %1759 = vmatpush1.msra.mxu0 0.0
    %1760 = vmatprep.subr.mxu0 0.0
    %1761 = vmatpush1.msra.mxu0 0.0
    %1762 = vmatprep.subr.mxu0 0.0
    %1763 = vmatpush1.msra.mxu0 0.0
    %1764 = vmatprep.subr.mxu0 0.0
    %1765 = vmatpush1.msra.mxu0 0.0
    %1766 = vmatprep.subr.mxu0 0.0
    %1767 = vmatpush1.msra.mxu0 0.0
    %1768 = vmatprep.subr.mxu0 0.0
    %1769 = vmatpush1.msra.mxu0 0.0
    %1770 = vmatprep.subr.mxu0 0.0
    %1771 = vmatpush1.msra.mxu0 0.0
    %1772 = vmatprep.subr.mxu0 0.0
    %1773 = vmatpush1.msra.mxu0 0.0
    %1774 = vmatprep.subr.mxu0 0.0
    %1775 = vmatpush1.msra.mxu0 0.0
    %1776 = vmatprep.subr.mxu0 0.0
    %1777 = vmatpush1.msra.mxu0 0.0
    %1778 = vmatprep.subr.mxu0 0.0
    %1779 = vmatpush1.msra.mxu0 0.0
    %1780 = vmatprep.subr.mxu0 0.0
    %1781 = vmatpush1.msra.mxu0 0.0
    %1782 = vmatprep.subr.mxu0 0.0
    %1783 = vmatpush1.msra.mxu0 0.0
    %1784 = vmatprep.subr.mxu0 0.0
    %1785 = vmatpush1.msra.mxu0 0.0
    %1786 = vmatprep.mubr.f32.mxu0 0.0
    %1787 = vmatmul.mubr.f32.gmra.mrb[0].mxu0 %v1720
    %v1788 = vpop.f32.mrb[0].mxu0
    %v1789 = vadd.f32 0.0, %v1788
    %v1790 = vpop.f32.mrb[0].mxu0
    %1791 = vdwg.mxu0
    %1794 = vrot.lane.b32.xlu0 %v1048, 32
    %v1795 = vpop.permute.xlu0 %1794
    %1796 = vrot.lane.b32.xlu0 %v1125, 32
    %v1797 = vpop.permute.xlu0 %1796
    %1802 = vrot.lane.b32.xlu0 %v1381, 64
    %v1803 = vpop.permute.xlu0 %1802
    %1804 = vrot.lane.b32.xlu0 %v1457, 64
    %v1805 = vpop.permute.xlu0 %1804
    %1810 = vrot.lane.b32.xlu0 %v1713, 96
    %v1811 = vpop.permute.xlu0 %1810
    %1812 = vrot.lane.b32.xlu0 %v1789, 96
    %v1813 = vpop.permute.xlu0 %1812
    %v1816 = vsel %vm470, %v718, %v1795
    %v1817 = vsel %vm470, %v791, %v1797
    %vm1818 = vcmask 523264
    %v1819 = vsel %vm1818, %v1816, %v1803
    %v1820 = vsel %vm1818, %v1817, %v1805
    %vm1821 = vcmask 785408
    %v1822 = vsel %vm1821, %v1819, %v1811
    %v1823 = vsel %vm1821, %v1820, %v1813
    %v1824 = vpack.c.bf16 %v1823, %v1822
    %v1825 = vld [vmem:[#allocation8] sm:$0xf]
    %v1826 = vld [vmem:[#allocation8 + $0x4] sm:$0xf]
    %v1827 = vld [vmem:[#allocation8 + $0x8] sm:$0xf]
    %v1828 = vld [vmem:[#allocation8 + $0xc] sm:$0xf]
    %v1829 = vld [vmem:[#allocation8 + $0x10] sm:$0xf]
    %v1830 = vld [vmem:[#allocation8 + $0x14] sm:$0xf]
    %v1831 = vld [vmem:[#allocation8 + $0x18] sm:$0xf]
    %v1832 = vld [vmem:[#allocation8 + $0x1c] sm:$0xf]
    %v1833 = vld [vmem:[#allocation8 + $0x20] sm:$0xf]
    %v1834 = vld [vmem:[#allocation8 + $0x24] sm:$0xf]
    %v1835 = vld [vmem:[#allocation8 + $0x28] sm:$0xf]
    %v1836 = vld [vmem:[#allocation8 + $0x2c] sm:$0xf]
    %v1837 = vld [vmem:[#allocation8 + $0x30] sm:$0xf]
    %v1838 = vld [vmem:[#allocation8 + $0x34] sm:$0xf]
    %v1839 = vld [vmem:[#allocation8 + $0x38] sm:$0xf]
    %v1840 = vld [vmem:[#allocation8 + $0x3c] sm:$0xf]
    %v1841 = vld [vmem:[#allocation10] sm:$0x1]
    %v1843 = vlaneseq
    %v1844 = vshrl.u32 %v1843, 7
    %v1845 = vsub.s32 0, %v1844
    %v1846 = vrot.slane %v1841, %v1845
    %v1864 = vunpack.c.l.b16 %v1825
    %v1865 = vunpack.c.l.b16 %v1826
    %v1866 = vunpack.c.l.b16 %v1827
    %v1867 = vunpack.c.l.b16 %v1828
    %v1868 = vunpack.c.l.b16 %v1829
    %v1869 = vunpack.c.l.b16 %v1830
    %v1870 = vunpack.c.l.b16 %v1831
    %v1871 = vunpack.c.l.b16 %v1832
    %v1872 = vunpack.c.l.b16 %v1833
    %v1873 = vunpack.c.l.b16 %v1834
    %v1874 = vunpack.c.l.b16 %v1835
    %v1875 = vunpack.c.l.b16 %v1836
    %v1876 = vunpack.c.l.b16 %v1837
    %v1877 = vunpack.c.l.b16 %v1838
    %v1878 = vunpack.c.l.b16 %v1839
    %v1879 = vunpack.c.l.b16 %v1840
    %v1880 = vpack.c.b16 %v1865, %v1864
    %v1881 = vpack.c.b16 %v1867, %v1866
    %v1882 = vpack.c.b16 %v1869, %v1868
    %v1883 = vpack.c.b16 %v1871, %v1870
    %v1884 = vpack.c.b16 %v1873, %v1872
    %v1885 = vpack.c.b16 %v1875, %v1874
    %v1886 = vpack.c.b16 %v1877, %v1876
    %v1887 = vpack.c.b16 %v1879, %v1878
    %1896 = vmatprep.subr.bf16.mxu0 0
    %1897 = vmatpush1.bf16.msra.mxu0 %v1880
    %1898 = vmatprep.subr.bf16.mxu0 0
    %1899 = vmatpush1.bf16.msra.mxu0 %v1881
    %1900 = vmatprep.subr.bf16.mxu0 0
    %1901 = vmatpush1.bf16.msra.mxu0 %v1882
    %1902 = vmatprep.subr.bf16.mxu0 0
    %1903 = vmatpush1.bf16.msra.mxu0 %v1883
    %1904 = vmatprep.subr.bf16.mxu0 0
    %1905 = vmatpush1.bf16.msra.mxu0 %v1884
    %1906 = vmatprep.subr.bf16.mxu0 0
    %1907 = vmatpush1.bf16.msra.mxu0 %v1885
    %1908 = vmatprep.subr.bf16.mxu0 0
    %1909 = vmatpush1.bf16.msra.mxu0 %v1886
    %1910 = vmatprep.subr.bf16.mxu0 0
    %1911 = vmatpush1.bf16.msra.mxu0 %v1887
    %1912 = vmatprep.subr.bf16.mxu0 0
    %1913 = vmatpush1.bf16.msra.mxu0 0
    %1914 = vmatprep.subr.bf16.mxu0 0
    %1915 = vmatpush1.bf16.msra.mxu0 0
    %1916 = vmatprep.subr.bf16.mxu0 0
    %1917 = vmatpush1.bf16.msra.mxu0 0
    %1918 = vmatprep.subr.bf16.mxu0 0
    %1919 = vmatpush1.bf16.msra.mxu0 0
    %1920 = vmatprep.subr.bf16.mxu0 0
    %1921 = vmatpush1.bf16.msra.mxu0 0
    %1922 = vmatprep.subr.bf16.mxu0 0
    %1923 = vmatpush1.bf16.msra.mxu0 0
    %1924 = vmatprep.subr.bf16.mxu0 0
    %1925 = vmatpush1.bf16.msra.mxu0 0
    %1926 = vmatprep.subr.bf16.mxu0 0
    %1927 = vmatpush1.bf16.msra.mxu0 0
    %1928 = vmatprep.mubr.bf16.mxu0 0
    %1929 = vmatmul.mubr.bf16.gmra.mrb[0].mxu0 %v1824
    %v1930 = vpop.f32.mrb[0].mxu0
    %v1931 = vadd.f32 %v1846, %v1930
    %v1932 = vpop.f32.mrb[0].mxu0
    %v1933 = vpop.f32.mrb[0].mxu0
    %v1934 = vadd.f32 %v1846, %v1933
    %v1935 = vpop.f32.mrb[0].mxu0
    %1936 = vdwg.mxu0
    %v1937 = vadd.f32 %v206, %v1931
    %v1938 = vadd.f32 %v207, %v1934
    %v1939 = vld [vmem:[#allocation11] sm:$0x1]
    %v1940 = vld [vmem:[#allocation13] sm:$0x1]
    %1941 = vadd.xlane.f32.xlu0 %v1937
    %v1942 = vpop.xlane.xlu0 %1941
    %1943 = vadd.xlane.f32.xlu0 %v1938
    %v1944 = vpop.xlane.xlu0 %1943
    %v1945 = vrcp.pop 128.0
    %v1946 = vmul.f32 %v1942, %v1945
    %v1947 = vmul.f32 %v1944, %v1945
    %v1948 = vsub.f32 %v1937, %v1946
    %v1949 = vsub.f32 %v1938, %v1947
    %v1950 = vmul.f32 %v1948, %v1948
    %v1951 = vmul.f32 %v1949, %v1949
    %1952 = vadd.xlane.f32.xlu0 %v1950
    %v1953 = vpop.xlane.xlu0 %1952
    %1954 = vadd.xlane.f32.xlu0 %v1951
    %v1955 = vpop.xlane.xlu0 %1954
    %v1956 = vmul.f32 %v1953, %v1945
    %v1957 = vmul.f32 %v1955, %v1945
    %v1958 = vadd.f32 %v1956, 1e-05
    %v1959 = vadd.f32 %v1957, 1e-05
    %v1960 = vrsqrt.pop %v1958
    %v1961 = vrsqrt.pop %v1959
    %v1962 = vmul.f32 %v1948, %v1960
    %v1963 = vmul.f32 %v1949, %v1961
    %v1965 = vlaneseq
    %v1966 = vshrl.u32 %v1965, 7
    %v1967 = vsub.s32 0, %v1966
    %v1968 = vrot.slane %v1939, %v1967
    %v1970 = vmul.f32 %v1962, %v1968
    %v1971 = vmul.f32 %v1963, %v1968
    %v1973 = vlaneseq
    %v1974 = vshrl.u32 %v1973, 7
    %v1975 = vsub.s32 0, %v1974
    %v1976 = vrot.slane %v1940, %v1975
    %v1978 = vadd.f32 %v1970, %v1976
    %v1979 = vadd.f32 %v1971, %v1976
    %v1980 = vpack.c.bf16 %v1979, %v1978
    %v1981 = vld [vmem:[#allocation14] sm:$0xff]
    %v1982 = vld [vmem:[#allocation14 + $0x8] sm:$0xff]
    %v1983 = vld [vmem:[#allocation14 + $0x10] sm:$0xff]
    %v1984 = vld [vmem:[#allocation14 + $0x18] sm:$0xff]
    %v1985 = vld [vmem:[#allocation14 + $0x20] sm:$0xff]
    %v1986 = vld [vmem:[#allocation14 + $0x28] sm:$0xff]
    %v1987 = vld [vmem:[#allocation14 + $0x30] sm:$0xff]
    %v1988 = vld [vmem:[#allocation14 + $0x38] sm:$0xff]
    %v1989 = vld [vmem:[#allocation14 + $0x40] sm:$0xff]
    %v1990 = vld [vmem:[#allocation14 + $0x48] sm:$0xff]
    %v1991 = vld [vmem:[#allocation14 + $0x50] sm:$0xff]
    %v1992 = vld [vmem:[#allocation14 + $0x58] sm:$0xff]
    %v1993 = vld [vmem:[#allocation14 + $0x60] sm:$0xff]
    %v1994 = vld [vmem:[#allocation14 + $0x68] sm:$0xff]
    %v1995 = vld [vmem:[#allocation14 + $0x70] sm:$0xff]
    %v1996 = vld [vmem:[#allocation14 + $0x78] sm:$0xff]
    %v1997 = vld [vmem:[#allocation16] sm:$0x3]
    %v1999 = vlaneseq
    %v2000 = vshrl.u32 %v1999, 7
    %v2001 = vsub.s32 0, %v2000
    %v2002 = vrot.slane %v1997, %v2001
    %v2003 = vlaneseq
    %v2004 = vshrl.u32 %v2003, 7
    %v2005 = vsub.s32 1, %v2004
    %v2006 = vrot.slane %v1997, %v2005
    %v2025 = vunpack.c.l.b16 %v1981
    %v2026 = vunpack.c.h.b16 %v1981
    %v2027 = vunpack.c.l.b16 %v1982
    %v2028 = vunpack.c.h.b16 %v1982
    %v2029 = vunpack.c.l.b16 %v1983
    %v2030 = vunpack.c.h.b16 %v1983
    %v2031 = vunpack.c.l.b16 %v1984
    %v2032 = vunpack.c.h.b16 %v1984
    %v2033 = vunpack.c.l.b16 %v1985
    %v2034 = vunpack.c.h.b16 %v1985
    %v2035 = vunpack.c.l.b16 %v1986
    %v2036 = vunpack.c.h.b16 %v1986
    %v2037 = vunpack.c.l.b16 %v1987
    %v2038 = vunpack.c.h.b16 %v1987
    %v2039 = vunpack.c.l.b16 %v1988
    %v2040 = vunpack.c.h.b16 %v1988
    %v2041 = vunpack.c.l.b16 %v1989
    %v2042 = vunpack.c.h.b16 %v1989
    %v2043 = vunpack.c.l.b16 %v1990
    %v2044 = vunpack.c.h.b16 %v1990
    %v2045 = vunpack.c.l.b16 %v1991
    %v2046 = vunpack.c.h.b16 %v1991
    %v2047 = vunpack.c.l.b16 %v1992
    %v2048 = vunpack.c.h.b16 %v1992
    %v2049 = vunpack.c.l.b16 %v1993
    %v2050 = vunpack.c.h.b16 %v1993
    %v2051 = vunpack.c.l.b16 %v1994
    %v2052 = vunpack.c.h.b16 %v1994
    %v2053 = vunpack.c.l.b16 %v1995
    %v2054 = vunpack.c.h.b16 %v1995
    %v2055 = vunpack.c.l.b16 %v1996
    %v2056 = vunpack.c.h.b16 %v1996
    %v2057 = vpack.c.b16 %v2027, %v2025
    %v2058 = vpack.c.b16 %v2028, %v2026
    %v2059 = vpack.c.b16 %v2031, %v2029
    %v2060 = vpack.c.b16 %v2032, %v2030
    %v2061 = vpack.c.b16 %v2035, %v2033
    %v2062 = vpack.c.b16 %v2036, %v2034
    %v2063 = vpack.c.b16 %v2039, %v2037
    %v2064 = vpack.c.b16 %v2040, %v2038
    %v2065 = vpack.c.b16 %v2043, %v2041
    %v2066 = vpack.c.b16 %v2044, %v2042
    %v2067 = vpack.c.b16 %v2047, %v2045
    %v2068 = vpack.c.b16 %v2048, %v2046
    %v2069 = vpack.c.b16 %v2051, %v2049
    %v2070 = vpack.c.b16 %v2052, %v2050
    %v2071 = vpack.c.b16 %v2055, %v2053
    %v2072 = vpack.c.b16 %v2056, %v2054
    %2089 = vmatprep.subr.bf16.mxu0 %v2058
    %2090 = vmatpush1.bf16.msra.mxu0 %v2057
    %2091 = vmatprep.subr.bf16.mxu0 %v2060
    %2092 = vmatpush1.bf16.msra.mxu0 %v2059
    %2093 = vmatprep.subr.bf16.mxu0 %v2062
    %2094 = vmatpush1.bf16.msra.mxu0 %v2061
    %2095 = vmatprep.subr.bf16.mxu0 %v2064
    %2096 = vmatpush1.bf16.msra.mxu0 %v2063
    %2097 = vmatprep.subr.bf16.mxu0 %v2066
    %2098 = vmatpush1.bf16.msra.mxu0 %v2065
    %2099 = vmatprep.subr.bf16.mxu0 %v2068
    %2100 = vmatpush1.bf16.msra.mxu0 %v2067
    %2101 = vmatprep.subr.bf16.mxu0 %v2070
    %2102 = vmatpush1.bf16.msra.mxu0 %v2069
    %2103 = vmatprep.subr.bf16.mxu0 %v2072
    %2104 = vmatpush1.bf16.msra.mxu0 %v2071
    %2105 = vmatprep.subr.bf16.mxu0 0
    %2106 = vmatpush1.bf16.msra.mxu0 0
    %2107 = vmatprep.subr.bf16.mxu0 0
    %2108 = vmatpush1.bf16.msra.mxu0 0
    %2109 = vmatprep.subr.bf16.mxu0 0
    %2110 = vmatpush1.bf16.msra.mxu0 0
    %2111 = vmatprep.subr.bf16.mxu0 0
    %2112 = vmatpush1.bf16.msra.mxu0 0
    %2113 = vmatprep.subr.bf16.mxu0 0
    %2114 = vmatpush1.bf16.msra.mxu0 0
    %2115 = vmatprep.subr.bf16.mxu0 0
    %2116 = vmatpush1.bf16.msra.mxu0 0
    %2117 = vmatprep.subr.bf16.mxu0 0
    %2118 = vmatpush1.bf16.msra.mxu0 0
    %2119 = vmatprep.subr.bf16.mxu0 0
    %2120 = vmatpush1.bf16.msra.mxu0 0
    %2121 = vmatprep.mubr.bf16.mxu0 0
    %2122 = vmatmul.mubr.bf16.gmra.mrb[0].mxu0 %v1980
    %v2123 = vpop.f32.mrb[0].mxu0
    %v2124 = vadd.f32 %v2002, %v2123
    %v2125 = vpop.f32.mrb[0].mxu0
    %v2126 = vadd.f32 %v2006, %v2125
    %v2127 = vpop.f32.mrb[0].mxu0
    %v2128 = vadd.f32 %v2002, %v2127
    %v2129 = vpop.f32.mrb[0].mxu0
    %v2130 = vadd.f32 %v2006, %v2129
    %2131 = vdwg.mxu0
    %v2132 = vmax.f32 %v2124, 0.0
    %v2133 = vmax.f32 %v2126, 0.0
    %v2134 = vmax.f32 %v2128, 0.0
    %v2135 = vmax.f32 %v2130, 0.0
    %v2136 = vpack.c.bf16 %v2134, %v2132
    %v2137 = vpack.c.bf16 %v2135, %v2133
    %v2138 = vld [vmem:[#allocation17] sm:$0xf]
    %v2139 = vld [vmem:[#allocation17 + $0x4] sm:$0xf]
    %v2140 = vld [vmem:[#allocation17 + $0x8] sm:$0xf]
    %v2141 = vld [vmem:[#allocation17 + $0xc] sm:$0xf]
    %v2142 = vld [vmem:[#allocation17 + $0x10] sm:$0xf]
    %v2143 = vld [vmem:[#allocation17 + $0x14] sm:$0xf]
    %v2144 = vld [vmem:[#allocation17 + $0x18] sm:$0xf]
    %v2145 = vld [vmem:[#allocation17 + $0x1c] sm:$0xf]
    %v2146 = vld [vmem:[#allocation17 + $0x20] sm:$0xf]
    %v2147 = vld [vmem:[#allocation17 + $0x24] sm:$0xf]
    %v2148 = vld [vmem:[#allocation17 + $0x28] sm:$0xf]
    %v2149 = vld [vmem:[#allocation17 + $0x2c] sm:$0xf]
    %v2150 = vld [vmem:[#allocation17 + $0x30] sm:$0xf]
    %v2151 = vld [vmem:[#allocation17 + $0x34] sm:$0xf]
    %v2152 = vld [vmem:[#allocation17 + $0x38] sm:$0xf]
    %v2153 = vld [vmem:[#allocation17 + $0x3c] sm:$0xf]
    %v2154 = vld [vmem:[#allocation17 + $0x40] sm:$0xf]
    %v2155 = vld [vmem:[#allocation17 + $0x44] sm:$0xf]
    %v2156 = vld [vmem:[#allocation17 + $0x48] sm:$0xf]
    %v2157 = vld [vmem:[#allocation17 + $0x4c] sm:$0xf]
    %v2158 = vld [vmem:[#allocation17 + $0x50] sm:$0xf]
    %v2159 = vld [vmem:[#allocation17 + $0x54] sm:$0xf]
    %v2160 = vld [vmem:[#allocation17 + $0x58] sm:$0xf]
    %v2161 = vld [vmem:[#allocation17 + $0x5c] sm:$0xf]
    %v2162 = vld [vmem:[#allocation17 + $0x60] sm:$0xf]
    %v2163 = vld [vmem:[#allocation17 + $0x64] sm:$0xf]
    %v2164 = vld [vmem:[#allocation17 + $0x68] sm:$0xf]
    %v2165 = vld [vmem:[#allocation17 + $0x6c] sm:$0xf]
    %v2166 = vld [vmem:[#allocation17 + $0x70] sm:$0xf]
    %v2167 = vld [vmem:[#allocation17 + $0x74] sm:$0xf]
    %v2168 = vld [vmem:[#allocation17 + $0x78] sm:$0xf]
    %v2169 = vld [vmem:[#allocation17 + $0x7c] sm:$0xf]
    %v2170 = vld [vmem:[#allocation19] sm:$0x1]
    %v2172 = vlaneseq
    %v2173 = vshrl.u32 %v2172, 7
    %v2174 = vsub.s32 0, %v2173
    %v2175 = vrot.slane %v2170, %v2174
    %v2209 = vunpack.c.l.b16 %v2138
    %v2210 = vunpack.c.l.b16 %v2139
    %v2211 = vunpack.c.l.b16 %v2140
    %v2212 = vunpack.c.l.b16 %v2141
    %v2213 = vunpack.c.l.b16 %v2142
    %v2214 = vunpack.c.l.b16 %v2143
    %v2215 = vunpack.c.l.b16 %v2144
    %v2216 = vunpack.c.l.b16 %v2145
    %v2217 = vunpack.c.l.b16 %v2146
    %v2218 = vunpack.c.l.b16 %v2147
    %v2219 = vunpack.c.l.b16 %v2148
    %v2220 = vunpack.c.l.b16 %v2149
    %v2221 = vunpack.c.l.b16 %v2150
    %v2222 = vunpack.c.l.b16 %v2151
    %v2223 = vunpack.c.l.b16 %v2152
    %v2224 = vunpack.c.l.b16 %v2153
    %v2225 = vunpack.c.l.b16 %v2154
    %v2226 = vunpack.c.l.b16 %v2155
    %v2227 = vunpack.c.l.b16 %v2156
    %v2228 = vunpack.c.l.b16 %v2157
    %v2229 = vunpack.c.l.b16 %v2158
    %v2230 = vunpack.c.l.b16 %v2159
    %v2231 = vunpack.c.l.b16 %v2160
    %v2232 = vunpack.c.l.b16 %v2161
    %v2233 = vunpack.c.l.b16 %v2162
    %v2234 = vunpack.c.l.b16 %v2163
    %v2235 = vunpack.c.l.b16 %v2164
    %v2236 = vunpack.c.l.b16 %v2165
    %v2237 = vunpack.c.l.b16 %v2166
    %v2238 = vunpack.c.l.b16 %v2167
    %v2239 = vunpack.c.l.b16 %v2168
    %v2240 = vunpack.c.l.b16 %v2169
    %v2241 = vpack.c.b16 %v2210, %v2209
    %v2242 = vpack.c.b16 %v2212, %v2211
    %v2243 = vpack.c.b16 %v2214, %v2213
    %v2244 = vpack.c.b16 %v2216, %v2215
    %v2245 = vpack.c.b16 %v2218, %v2217
    %v2246 = vpack.c.b16 %v2220, %v2219
    %v2247 = vpack.c.b16 %v2222, %v2221
    %v2248 = vpack.c.b16 %v2224, %v2223
    %v2249 = vpack.c.b16 %v2226, %v2225
    %v2250 = vpack.c.b16 %v2228, %v2227
    %v2251 = vpack.c.b16 %v2230, %v2229
    %v2252 = vpack.c.b16 %v2232, %v2231
    %v2253 = vpack.c.b16 %v2234, %v2233
    %v2254 = vpack.c.b16 %v2236, %v2235
    %v2255 = vpack.c.b16 %v2238, %v2237
    %v2256 = vpack.c.b16 %v2240, %v2239
    %2273 = vmatprep.subr.bf16.mxu0 0
    %2274 = vmatpush1.bf16.msra.mxu0 %v2241
    %2275 = vmatprep.subr.bf16.mxu0 0
    %2276 = vmatpush1.bf16.msra.mxu0 %v2242
    %2277 = vmatprep.subr.bf16.mxu0 0
    %2278 = vmatpush1.bf16.msra.mxu0 %v2243
    %2279 = vmatprep.subr.bf16.mxu0 0
    %2280 = vmatpush1.bf16.msra.mxu0 %v2244
    %2281 = vmatprep.subr.bf16.mxu0 0
    %2282 = vmatpush1.bf16.msra.mxu0 %v2245
    %2283 = vmatprep.subr.bf16.mxu0 0
    %2284 = vmatpush1.bf16.msra.mxu0 %v2246
    %2285 = vmatprep.subr.bf16.mxu0 0
    %2286 = vmatpush1.bf16.msra.mxu0 %v2247
    %2287 = vmatprep.subr.bf16.mxu0 0
    %2288 = vmatpush1.bf16.msra.mxu0 %v2248
    %2289 = vmatprep.subr.bf16.mxu0 0
    %2290 = vmatpush1.bf16.msra.mxu0 %v2249
    %2291 = vmatprep.subr.bf16.mxu0 0
    %2292 = vmatpush1.bf16.msra.mxu0 %v2250
    %2293 = vmatprep.subr.bf16.mxu0 0
    %2294 = vmatpush1.bf16.msra.mxu0 %v2251
    %2295 = vmatprep.subr.bf16.mxu0 0
    %2296 = vmatpush1.bf16.msra.mxu0 %v2252
    %2297 = vmatprep.subr.bf16.mxu0 0
    %2298 = vmatpush1.bf16.msra.mxu0 %v2253
    %2299 = vmatprep.subr.bf16.mxu0 0
    %2300 = vmatpush1.bf16.msra.mxu0 %v2254
    %2301 = vmatprep.subr.bf16.mxu0 0
    %2302 = vmatpush1.bf16.msra.mxu0 %v2255
    %2303 = vmatprep.subr.bf16.mxu0 0
    %2304 = vmatpush1.bf16.msra.mxu0 %v2256
    %2305 = vmatprep.mubr.bf16.mxu0 %v2137
    %2306 = vmatmul.mubr.bf16.gmra.mrb[0].mxu0 %v2136
    %v2307 = vpop.f32.mrb[0].mxu0
    %v2308 = vadd.f32 %v2175, %v2307
    %v2309 = vpop.f32.mrb[0].mxu0
    %v2310 = vpop.f32.mrb[0].mxu0
    %v2311 = vadd.f32 %v2175, %v2310
    %v2312 = vpop.f32.mrb[0].mxu0
    %2313 = vdwg.mxu0
    %v2314 = vadd.f32 %v1978, %v2308
    %v2315 = vadd.f32 %v1979, %v2311
    %v2316 = vld [vmem:[#allocation20] sm:$0x1]
    %v2317 = vld [vmem:[#allocation22] sm:$0x1]
    %2318 = vadd.xlane.f32.xlu0 %v2314
    %v2319 = vpop.xlane.xlu0 %2318
    %2320 = vadd.xlane.f32.xlu0 %v2315
    %v2321 = vpop.xlane.xlu0 %2320
    %v2322 = vmul.f32 %v2319, %v1945
    %v2323 = vmul.f32 %v2321, %v1945
    %v2324 = vsub.f32 %v2314, %v2322
    %v2325 = vsub.f32 %v2315, %v2323
    %v2326 = vmul.f32 %v2324, %v2324
    %v2327 = vmul.f32 %v2325, %v2325
    %2328 = vadd.xlane.f32.xlu0 %v2326
    %v2329 = vpop.xlane.xlu0 %2328
    %2330 = vadd.xlane.f32.xlu0 %v2327
    %v2331 = vpop.xlane.xlu0 %2330
    %v2332 = vmul.f32 %v2329, %v1945
    %v2333 = vmul.f32 %v2331, %v1945
    %v2334 = vadd.f32 %v2332, 1e-05
    %v2335 = vadd.f32 %v2333, 1e-05
    %v2336 = vrsqrt.pop %v2334
    %v2337 = vrsqrt.pop %v2335
    %v2338 = vmul.f32 %v2324, %v2336
    %v2339 = vmul.f32 %v2325, %v2337
    %v2341 = vlaneseq
    %v2342 = vshrl.u32 %v2341, 7
    %v2343 = vsub.s32 0, %v2342
    %v2344 = vrot.slane %v2316, %v2343
    %v2346 = vmul.f32 %v2338, %v2344
    %v2347 = vmul.f32 %v2339, %v2344
    %v2349 = vlaneseq
    %v2350 = vshrl.u32 %v2349, 7
    %v2351 = vsub.s32 0, %v2350
    %v2352 = vrot.slane %v2317, %v2351
    %v2354 = vadd.f32 %v2346, %v2352
    %v2355 = vadd.f32 %v2347, %v2352
    %v2356 = vadd.f32 %v2354, %v2355
    %2357 = vst [vmem:[#allocation23] sm:$0xff] %v2356
    // Predicated region
    $region106: #{transformer_classifier.1} parent=1 // pred_check
      _
    $region107: #{transformer_classifier.1} parent=1 // pred_check_branch
      %2359 = sbr.rel (0) target = $region109
    $region108: #{transformer_classifier.1} parent=1 // pred_region
      %s2361 = ssub.s32 128, 128
      %2362 = vsyncadd [#allocation4], %s2361
      %s2364 = sshll.u32 [#allocation23], 4
      %s2365 = int_to_ptr.vmem [resolvable:$true] %s2364
      %2367 = dma.vmem_to_hbm [thread:$0]  %s2365, 128, %s13, [#allocation4]
    $region109: #{transformer_classifier.1} parent=1 // pred_fallthru
      _
    // Predicated region
    $region110: #{transformer_classifier.1} parent=1 // pred_check
      _
    $region111: #{transformer_classifier.1} parent=1 // pred_check_branch
      %2369 = sbr.rel (0) target = $region113
    $region112: #{transformer_classifier.1} parent=1 // pred_region
      %2370 = dma.done [#allocation4], 128
    $region113: #{transformer_classifier.1} parent=1 // pred_fallthru
      _
    %2371 = vsyncpa [#allocation3], 1
    %2372 = vsyncpa [#allocation6], 1
    %2373 = vsyncpa [#allocation9], 1
    %2374 = vsyncpa [#allocation12], 1
    %2375 = vsyncpa [#allocation15], 1
    %2376 = vsyncpa [#allocation18], 1
    %2377 = vsyncpa [#allocation21], 1
    %2378 = vsyncpa [#allocation4], 1

</llo_original>
